<compile_context>
chip_gen: v7x
topology: tpu7x:2x2x1
jax: 0.10.0
libtpu: 0.0.40
codegen_flags: <defaults>
</compile_context>

<pallas_src>
import functools

import jax
import jax.numpy as jnp
from jax import lax
from jax.experimental import pallas as pl
from jax.experimental.pallas import tpu as pltpu


_AE_NAMES = ["enc_1", "enc_2", "enc_3", "z_layer",
             "dec_1", "dec_2", "dec_3", "x_bar"]
_GNN_NAMES = ["gnn_1", "gnn_2", "gnn_3", "gnn_4", "gnn_5"]


def _vmem():
    # full-array block resident in VMEM (demo shapes are tiny)
    return pl.BlockSpec(memory_space=pltpu.MemorySpace.VMEM)


# ---------------------------------------------------------------------------
# Fused kernel body: AE stack + GNN stack (with residuals) + heads
# ---------------------------------------------------------------------------
def _ajscn_kernel(
    x_ref, adj_ref,
    ew1, eb1, ew2, eb2, ew3, eb3, zw, zb,
    dw1, db1, dw2, db2, dw3, db3, xbw, xbb,
    gw1, gw2, gw3, gw4, gw5,
    mu_ref,
    out_ref,
    *, v):
    x = x_ref[...]
    adj = adj_ref[...]          # loaded into vregs once, reused by all 5 GNN layers
    mu = mu_ref[...]

    def lin(h, w_ref, b_ref, relu):
        y = jnp.dot(h, w_ref[...], preferred_element_type=jnp.float32)
        y = y + b_ref[...]                       # b is [1, Dout]
        return jnp.maximum(y, 0.0) if relu else y

    def gnn(h, w_ref, relu):
        # GNNLayer: support = h @ W ; out = adj @ support ; optional ReLU, no bias
        support = jnp.dot(h, w_ref[...], preferred_element_type=jnp.float32)
        out = jnp.dot(adj, support, preferred_element_type=jnp.float32)
        return jnp.maximum(out, 0.0) if relu else out

    # --- AE ---
    tra1 = lin(x, ew1, eb1, True)
    tra2 = lin(tra1, ew2, eb2, True)
    tra3 = lin(tra2, ew3, eb3, True)
    z = lin(tra3, zw, zb, False)
    d1 = lin(z, dw1, db1, True)
    d2 = lin(d1, dw2, db2, True)
    d3 = lin(d2, dw3, db3, True)
    x_bar = lin(d3, xbw, xbb, False)

    # --- GNN stack with fused residual adds ---
    h1 = gnn(x, gw1, True)
    h2 = gnn(h1 + tra1, gw2, True)
    h3 = gnn(h2 + tra2, gw3, True)
    h4 = gnn(h3 + tra3, gw4, True)
    h = gnn(h4 + z, gw5, False)

    # --- heads ---
    # A_pred = sigmoid(h @ h^T): contract last dims, no .T materialization
    hh = lax.dot_general(h, h, (((1,), (1,)), ((), ())),
                         preferred_element_type=jnp.float32)
    a_pred = pl.reciprocal(1.0 + jnp.exp(-hh), approx=True)

    # predict = softmax(h, dim=1)
    m = jnp.max(h, axis=1, keepdims=True)
    e = jnp.exp(h - m)
    predict = e * pl.reciprocal(jnp.sum(e, axis=1, keepdims=True), approx=True)

    # Student-t soft assignments (q on z, s on h); mu2 hoisted, computed once
    mu2 = jnp.sum(mu * mu, axis=1)[None, :]      # [1, K]
    inv_v = 1.0 / v
    exponent = (v + 1.0) / 2.0

    def tdist(xv):
        x2 = jnp.sum(xv * xv, axis=1, keepdims=True)            # [N, 1]
        xmu = lax.dot_general(xv, mu, (((1,), (1,)), ((), ())),
                              preferred_element_type=jnp.float32)  # [N, K]
        d2 = jnp.maximum(x2 + mu2 - 2.0 * xmu, 0.0)   # guard fp cancellation
        t = pl.reciprocal(1.0 + d2 * inv_v, approx=True)
        if exponent != 1.0:
            # general v: single exp/log instead of `**` (trace-time gate; for the
            # default v=1 this branch is never emitted)
            t = jnp.exp(exponent * jnp.log(t))
        return t * pl.reciprocal(jnp.sum(t, axis=1, keepdims=True), approx=True)

    q = tdist(z)
    s = tdist(h)

    # --- pack all outputs into one lane-dense slab and store once ---
    n = x.shape[0]
    parts = [x_bar, q, s, predict, z, h, a_pred]
    total = sum(p.shape[1] for p in parts)
    pad = out_ref.shape[1] - total
    if pad > 0:
        parts.append(jnp.zeros((n, pad), jnp.float32))
    out_ref[...] = jnp.concatenate(parts, axis=1)


# ---------------------------------------------------------------------------
# Wrapper: single pallas_call, then split the packed slab
# ---------------------------------------------------------------------------
def _cost_estimate(x, adj, params, padded_width):
    n = x.shape[0]
    k, n_z = params["cluster"].shape
    flops = 0
    bytes_accessed = x.size * 4 + adj.size * 4 + params["cluster"].size * 4
    for name in _AE_NAMES:
        w, b = params[name]
        flops += 2 * n * w.shape[0] * w.shape[1]
        bytes_accessed += (w.size + b.size) * 4
    for name in _GNN_NAMES:
        w = params[name]
        flops += 2 * n * w.shape[0] * w.shape[1] + 2 * n * n * w.shape[1]
        bytes_accessed += w.size * 4
    flops += 2 * n * n * n_z          # h h^T
    flops += 2 * (2 * n * k * n_z)    # q / s distance matmuls
    transcendentals = n * n + n * n_z + 3 * n + 2 * n * k
    bytes_accessed += n * padded_width * 4
    return pl.CostEstimate(flops=flops,
                           transcendentals=transcendentals,
                           bytes_accessed=bytes_accessed)


def ajscn_forward(params, x, adj, v=1.0):
    n, n_input = x.shape
    k, n_z = params["cluster"].shape

    widths = [n_input, k, k, n_z, n_z, n_z, n]   # x_bar, q, s, predict, z, h, A_pred
    total = sum(widths)
    padded = max(128, ((total + 127) // 128) * 128)   # lane-dense output slab

    inputs = [x, adj]
    for name in _AE_NAMES:
        w, b = params[name]
        inputs += [w, b]
    for name in _GNN_NAMES:
        inputs.append(params[name])
    inputs.append(params["cluster"])

    out = pl.pallas_call(
        functools.partial(_ajscn_kernel, v=float(v)),
        out_shape=jax.ShapeDtypeStruct((n, padded), jnp.float32),
        in_specs=[_vmem()] * len(inputs),
        out_specs=_vmem(),
        cost_estimate=_cost_estimate(x, adj, params, padded),
        compiler_params=pltpu.CompilerParams(vmem_limit_bytes=64 << 20),
    )(*inputs)

    pieces = []
    off = 0
    for w in widths:
        pieces.append(out[:, off:off + w])
        off += w
    x_bar, q, s, predict, z, h, A_pred = pieces
    return x_bar, q, s, predict, z, h, A_pred


# ---------------------------------------------------------------------------
# Parameter construction (deterministic, xavier-ish)
# ---------------------------------------------------------------------------
def _init_linear(key, d_in, d_out):
    kw, kb = jax.random.split(key)
    scale = (2.0 / (d_in + d_out)) ** 0.5
    w = scale * jax.random.normal(kw, (d_in, d_out), jnp.float32)
    b = 0.01 * jax.random.normal(kb, (1, d_out), jnp.float32)
    return w, b


def _init_gnn(key, d_in, d_out):
    scale = (2.0 / (d_in + d_out)) ** 0.5
    return scale * jax.random.normal(key, (d_in, d_out), jnp.float32)


def make_params(key, n_enc_1, n_enc_2, n_enc_3, n_dec_1, n_dec_2, n_dec_3,
                n_input, n_z, n_clusters):
    keys = jax.random.split(key, 16)
    p = {}
    dims = [
        ("enc_1", n_input, n_enc_1), ("enc_2", n_enc_1, n_enc_2),
        ("enc_3", n_enc_2, n_enc_3), ("z_layer", n_enc_3, n_z),
        ("dec_1", n_z, n_dec_1), ("dec_2", n_dec_1, n_dec_2),
        ("dec_3", n_dec_2, n_dec_3), ("x_bar", n_dec_3, n_input),
    ]
    for i, (name, di, do) in enumerate(dims):
        p[name] = _init_linear(keys[i], di, do)
    gdims = [
        ("gnn_1", n_input, n_enc_1), ("gnn_2", n_enc_1, n_enc_2),
        ("gnn_3", n_enc_2, n_enc_3), ("gnn_4", n_enc_3, n_z),
        ("gnn_5", n_z, n_z),
    ]
    for i, (name, di, do) in enumerate(gdims):
        p[name] = _init_gnn(keys[8 + i], di, do)
    scale = (2.0 / (n_clusters + n_z)) ** 0.5
    p["cluster"] = scale * jax.random.normal(keys[13], (n_clusters, n_z), jnp.float32)
    return p


# ---------------------------------------------------------------------------
if __name__ == "__main__":
    # small, AE/GNN-consistent shapes
    N = 8            # number of graph nodes / samples
    n_input = 32
    n_enc_1, n_enc_2, n_enc_3 = 16, 16, 32
    n_dec_1, n_dec_2, n_dec_3 = 32, 16, 16
    n_z = 8
    n_clusters = 4

    root = jax.random.PRNGKey(0)
    k_param, k_x, k_adj = jax.random.split(root, 3)

    params = make_params(k_param, n_enc_1, n_enc_2, n_enc_3,
                         n_dec_1, n_dec_2, n_dec_3, n_input, n_z, n_clusters)

    x = jax.random.normal(k_x, (N, n_input), jnp.float32)

    # symmetric row-normalized adjacency with self loops
    a = (jax.random.uniform(k_adj, (N, N)) > 0.6).astype(jnp.float32)
    a = jnp.maximum(a, a.T) + jnp.eye(N, dtype=jnp.float32)
    adj = a / jnp.sum(a, axis=1, keepdims=True)

    outs = ajscn_forward(params, x, adj, v=1.0)
    outs = jax.block_until_ready(outs)

    x_bar, q, s, predict, z, h, A_pred = outs
    assert x_bar.shape == (N, n_input)
    assert q.shape == (N, n_clusters) and s.shape == (N, n_clusters)
    assert predict.shape == (N, n_z)
    assert z.shape == (N, n_z) and h.shape == (N, n_z)
    assert A_pred.shape == (N, N)
    # sanity: softmax / student-t rows sum to ~1 (approx reciprocal tolerance)
    assert jnp.allclose(jnp.sum(predict, axis=1), 1.0, atol=1e-2)
    assert jnp.allclose(jnp.sum(q, axis=1), 1.0, atol=1e-2)
    assert jnp.allclose(jnp.sum(s, axis=1), 1.0, atol=1e-2)

    print("KERNEL_OK")
</pallas_src>

<mosaic_0001>
module attributes {stable_mosaic.version = 11 : i64} {
  func.func @_ajscn_kernel(%arg0: memref<8x32xf32, #tpu.memory_space<vmem>>, %arg1: memref<8x8xf32, #tpu.memory_space<vmem>>, %arg2: memref<32x16xf32, #tpu.memory_space<vmem>>, %arg3: memref<1x16xf32, #tpu.memory_space<vmem>>, %arg4: memref<16x16xf32, #tpu.memory_space<vmem>>, %arg5: memref<1x16xf32, #tpu.memory_space<vmem>>, %arg6: memref<16x32xf32, #tpu.memory_space<vmem>>, %arg7: memref<1x32xf32, #tpu.memory_space<vmem>>, %arg8: memref<32x8xf32, #tpu.memory_space<vmem>>, %arg9: memref<1x8xf32, #tpu.memory_space<vmem>>, %arg10: memref<8x32xf32, #tpu.memory_space<vmem>>, %arg11: memref<1x32xf32, #tpu.memory_space<vmem>>, %arg12: memref<32x16xf32, #tpu.memory_space<vmem>>, %arg13: memref<1x16xf32, #tpu.memory_space<vmem>>, %arg14: memref<16x16xf32, #tpu.memory_space<vmem>>, %arg15: memref<1x16xf32, #tpu.memory_space<vmem>>, %arg16: memref<16x32xf32, #tpu.memory_space<vmem>>, %arg17: memref<1x32xf32, #tpu.memory_space<vmem>>, %arg18: memref<32x16xf32, #tpu.memory_space<vmem>>, %arg19: memref<16x16xf32, #tpu.memory_space<vmem>>, %arg20: memref<16x32xf32, #tpu.memory_space<vmem>>, %arg21: memref<32x8xf32, #tpu.memory_space<vmem>>, %arg22: memref<8x8xf32, #tpu.memory_space<vmem>>, %arg23: memref<4x8xf32, #tpu.memory_space<vmem>>, %arg24: memref<8x128xf32, #tpu.memory_space<vmem>>) attributes {dimension_semantics = [], scalar_prefetch = 0 : i64, scratch_operands = 0 : i64, tpu.core_type = #tpu.core_type<tc>} {
    %c0 = arith.constant 0 : index
    %c0_0 = arith.constant 0 : index
    %0 = vector.load %arg0[%c0, %c0_0] : memref<8x32xf32, #tpu.memory_space<vmem>>, vector<8x32xf32>
    %c0_1 = arith.constant 0 : index
    %c0_2 = arith.constant 0 : index
    %1 = vector.load %arg1[%c0_1, %c0_2] : memref<8x8xf32, #tpu.memory_space<vmem>>, vector<8x8xf32>
    %c0_3 = arith.constant 0 : index
    %c0_4 = arith.constant 0 : index
    %2 = vector.load %arg23[%c0_3, %c0_4] : memref<4x8xf32, #tpu.memory_space<vmem>>, vector<4x8xf32>
    %c0_5 = arith.constant 0 : index
    %c0_6 = arith.constant 0 : index
    %3 = vector.load %arg2[%c0_5, %c0_6] : memref<32x16xf32, #tpu.memory_space<vmem>>, vector<32x16xf32>
    %cst = arith.constant dense<0.000000e+00> : vector<8x16xf32>
    %4 = tpu.matmul %0, %3, %cst {dimension_numbers = #tpu.dot_dimension_numbers<[1], [0], [0], [1], [0, 0, 1, 1], [], []>} : vector<8x32xf32>, vector<32x16xf32>, vector<8x16xf32> -> vector<8x16xf32>
    %c0_7 = arith.constant 0 : index
    %c0_8 = arith.constant 0 : index
    %5 = vector.load %arg3[%c0_7, %c0_8] : memref<1x16xf32, #tpu.memory_space<vmem>>, vector<1x16xf32>
    %6 = vector.broadcast %5 : vector<1x16xf32> to vector<8x16xf32>
    %7 = arith.addf %4, %6 : vector<8x16xf32>
    %cst_9 = arith.constant 0.000000e+00 : f32
    %8 = vector.broadcast %cst_9 : f32 to vector<8x16xf32>
    %9 = arith.maximumf %7, %8 : vector<8x16xf32>
    %c0_10 = arith.constant 0 : index
    %c0_11 = arith.constant 0 : index
    %10 = vector.load %arg4[%c0_10, %c0_11] : memref<16x16xf32, #tpu.memory_space<vmem>>, vector<16x16xf32>
    %cst_12 = arith.constant dense<0.000000e+00> : vector<8x16xf32>
    %11 = tpu.matmul %9, %10, %cst_12 {dimension_numbers = #tpu.dot_dimension_numbers<[1], [0], [0], [1], [0, 0, 1, 1], [], []>} : vector<8x16xf32>, vector<16x16xf32>, vector<8x16xf32> -> vector<8x16xf32>
    %c0_13 = arith.constant 0 : index
    %c0_14 = arith.constant 0 : index
    %12 = vector.load %arg5[%c0_13, %c0_14] : memref<1x16xf32, #tpu.memory_space<vmem>>, vector<1x16xf32>
    %13 = vector.broadcast %12 : vector<1x16xf32> to vector<8x16xf32>
    %14 = arith.addf %11, %13 : vector<8x16xf32>
    %cst_15 = arith.constant 0.000000e+00 : f32
    %15 = vector.broadcast %cst_15 : f32 to vector<8x16xf32>
    %16 = arith.maximumf %14, %15 : vector<8x16xf32>
    %c0_16 = arith.constant 0 : index
    %c0_17 = arith.constant 0 : index
    %17 = vector.load %arg6[%c0_16, %c0_17] : memref<16x32xf32, #tpu.memory_space<vmem>>, vector<16x32xf32>
    %cst_18 = arith.constant dense<0.000000e+00> : vector<8x32xf32>
    %18 = tpu.matmul %16, %17, %cst_18 {dimension_numbers = #tpu.dot_dimension_numbers<[1], [0], [0], [1], [0, 0, 1, 1], [], []>} : vector<8x16xf32>, vector<16x32xf32>, vector<8x32xf32> -> vector<8x32xf32>
    %c0_19 = arith.constant 0 : index
    %c0_20 = arith.constant 0 : index
    %19 = vector.load %arg7[%c0_19, %c0_20] : memref<1x32xf32, #tpu.memory_space<vmem>>, vector<1x32xf32>
    %20 = vector.broadcast %19 : vector<1x32xf32> to vector<8x32xf32>
    %21 = arith.addf %18, %20 : vector<8x32xf32>
    %cst_21 = arith.constant 0.000000e+00 : f32
    %22 = vector.broadcast %cst_21 : f32 to vector<8x32xf32>
    %23 = arith.maximumf %21, %22 : vector<8x32xf32>
    %c0_22 = arith.constant 0 : index
    %c0_23 = arith.constant 0 : index
    %24 = vector.load %arg8[%c0_22, %c0_23] : memref<32x8xf32, #tpu.memory_space<vmem>>, vector<32x8xf32>
    %cst_24 = arith.constant dense<0.000000e+00> : vector<8x8xf32>
    %25 = tpu.matmul %23, %24, %cst_24 {dimension_numbers = #tpu.dot_dimension_numbers<[1], [0], [0], [1], [0, 0, 1, 1], [], []>} : vector<8x32xf32>, vector<32x8xf32>, vector<8x8xf32> -> vector<8x8xf32>
    %c0_25 = arith.constant 0 : index
    %c0_26 = arith.constant 0 : index
    %26 = vector.load %arg9[%c0_25, %c0_26] : memref<1x8xf32, #tpu.memory_space<vmem>>, vector<1x8xf32>
    %27 = vector.broadcast %26 : vector<1x8xf32> to vector<8x8xf32>
    %28 = arith.addf %25, %27 : vector<8x8xf32>
    %c0_27 = arith.constant 0 : index
    %c0_28 = arith.constant 0 : index
    %29 = vector.load %arg10[%c0_27, %c0_28] : memref<8x32xf32, #tpu.memory_space<vmem>>, vector<8x32xf32>
    %cst_29 = arith.constant dense<0.000000e+00> : vector<8x32xf32>
    %30 = tpu.matmul %28, %29, %cst_29 {dimension_numbers = #tpu.dot_dimension_numbers<[1], [0], [0], [1], [0, 0, 1, 1], [], []>} : vector<8x8xf32>, vector<8x32xf32>, vector<8x32xf32> -> vector<8x32xf32>
    %c0_30 = arith.constant 0 : index
    %c0_31 = arith.constant 0 : index
    %31 = vector.load %arg11[%c0_30, %c0_31] : memref<1x32xf32, #tpu.memory_space<vmem>>, vector<1x32xf32>
    %32 = vector.broadcast %31 : vector<1x32xf32> to vector<8x32xf32>
    %33 = arith.addf %30, %32 : vector<8x32xf32>
    %cst_32 = arith.constant 0.000000e+00 : f32
    %34 = vector.broadcast %cst_32 : f32 to vector<8x32xf32>
    %35 = arith.maximumf %33, %34 : vector<8x32xf32>
    %c0_33 = arith.constant 0 : index
    %c0_34 = arith.constant 0 : index
    %36 = vector.load %arg12[%c0_33, %c0_34] : memref<32x16xf32, #tpu.memory_space<vmem>>, vector<32x16xf32>
    %cst_35 = arith.constant dense<0.000000e+00> : vector<8x16xf32>
    %37 = tpu.matmul %35, %36, %cst_35 {dimension_numbers = #tpu.dot_dimension_numbers<[1], [0], [0], [1], [0, 0, 1, 1], [], []>} : vector<8x32xf32>, vector<32x16xf32>, vector<8x16xf32> -> vector<8x16xf32>
    %c0_36 = arith.constant 0 : index
    %c0_37 = arith.constant 0 : index
    %38 = vector.load %arg13[%c0_36, %c0_37] : memref<1x16xf32, #tpu.memory_space<vmem>>, vector<1x16xf32>
    %39 = vector.broadcast %38 : vector<1x16xf32> to vector<8x16xf32>
    %40 = arith.addf %37, %39 : vector<8x16xf32>
    %cst_38 = arith.constant 0.000000e+00 : f32
    %41 = vector.broadcast %cst_38 : f32 to vector<8x16xf32>
    %42 = arith.maximumf %40, %41 : vector<8x16xf32>
    %c0_39 = arith.constant 0 : index
    %c0_40 = arith.constant 0 : index
    %43 = vector.load %arg14[%c0_39, %c0_40] : memref<16x16xf32, #tpu.memory_space<vmem>>, vector<16x16xf32>
    %cst_41 = arith.constant dense<0.000000e+00> : vector<8x16xf32>
    %44 = tpu.matmul %42, %43, %cst_41 {dimension_numbers = #tpu.dot_dimension_numbers<[1], [0], [0], [1], [0, 0, 1, 1], [], []>} : vector<8x16xf32>, vector<16x16xf32>, vector<8x16xf32> -> vector<8x16xf32>
    %c0_42 = arith.constant 0 : index
    %c0_43 = arith.constant 0 : index
    %45 = vector.load %arg15[%c0_42, %c0_43] : memref<1x16xf32, #tpu.memory_space<vmem>>, vector<1x16xf32>
    %46 = vector.broadcast %45 : vector<1x16xf32> to vector<8x16xf32>
    %47 = arith.addf %44, %46 : vector<8x16xf32>
    %cst_44 = arith.constant 0.000000e+00 : f32
    %48 = vector.broadcast %cst_44 : f32 to vector<8x16xf32>
    %49 = arith.maximumf %47, %48 : vector<8x16xf32>
    %c0_45 = arith.constant 0 : index
    %c0_46 = arith.constant 0 : index
    %50 = vector.load %arg16[%c0_45, %c0_46] : memref<16x32xf32, #tpu.memory_space<vmem>>, vector<16x32xf32>
    %cst_47 = arith.constant dense<0.000000e+00> : vector<8x32xf32>
    %51 = tpu.matmul %49, %50, %cst_47 {dimension_numbers = #tpu.dot_dimension_numbers<[1], [0], [0], [1], [0, 0, 1, 1], [], []>} : vector<8x16xf32>, vector<16x32xf32>, vector<8x32xf32> -> vector<8x32xf32>
    %c0_48 = arith.constant 0 : index
    %c0_49 = arith.constant 0 : index
    %52 = vector.load %arg17[%c0_48, %c0_49] : memref<1x32xf32, #tpu.memory_space<vmem>>, vector<1x32xf32>
    %53 = vector.broadcast %52 : vector<1x32xf32> to vector<8x32xf32>
    %54 = arith.addf %51, %53 : vector<8x32xf32>
    %c0_50 = arith.constant 0 : index
    %c0_51 = arith.constant 0 : index
    %55 = vector.load %arg18[%c0_50, %c0_51] : memref<32x16xf32, #tpu.memory_space<vmem>>, vector<32x16xf32>
    %cst_52 = arith.constant dense<0.000000e+00> : vector<8x16xf32>
    %56 = tpu.matmul %0, %55, %cst_52 {dimension_numbers = #tpu.dot_dimension_numbers<[1], [0], [0], [1], [0, 0, 1, 1], [], []>} : vector<8x32xf32>, vector<32x16xf32>, vector<8x16xf32> -> vector<8x16xf32>
    %cst_53 = arith.constant dense<0.000000e+00> : vector<8x16xf32>
    %57 = tpu.matmul %1, %56, %cst_53 {dimension_numbers = #tpu.dot_dimension_numbers<[1], [0], [0], [1], [0, 0, 1, 1], [], []>} : vector<8x8xf32>, vector<8x16xf32>, vector<8x16xf32> -> vector<8x16xf32>
    %cst_54 = arith.constant 0.000000e+00 : f32
    %58 = vector.broadcast %cst_54 : f32 to vector<8x16xf32>
    %59 = arith.maximumf %57, %58 : vector<8x16xf32>
    %60 = arith.addf %59, %9 : vector<8x16xf32>
    %c0_55 = arith.constant 0 : index
    %c0_56 = arith.constant 0 : index
    %61 = vector.load %arg19[%c0_55, %c0_56] : memref<16x16xf32, #tpu.memory_space<vmem>>, vector<16x16xf32>
    %cst_57 = arith.constant dense<0.000000e+00> : vector<8x16xf32>
    %62 = tpu.matmul %60, %61, %cst_57 {dimension_numbers = #tpu.dot_dimension_numbers<[1], [0], [0], [1], [0, 0, 1, 1], [], []>} : vector<8x16xf32>, vector<16x16xf32>, vector<8x16xf32> -> vector<8x16xf32>
    %cst_58 = arith.constant dense<0.000000e+00> : vector<8x16xf32>
    %63 = tpu.matmul %1, %62, %cst_58 {dimension_numbers = #tpu.dot_dimension_numbers<[1], [0], [0], [1], [0, 0, 1, 1], [], []>} : vector<8x8xf32>, vector<8x16xf32>, vector<8x16xf32> -> vector<8x16xf32>
    %cst_59 = arith.constant 0.000000e+00 : f32
    %64 = vector.broadcast %cst_59 : f32 to vector<8x16xf32>
    %65 = arith.maximumf %63, %64 : vector<8x16xf32>
    %66 = arith.addf %65, %16 : vector<8x16xf32>
    %c0_60 = arith.constant 0 : index
    %c0_61 = arith.constant 0 : index
    %67 = vector.load %arg20[%c0_60, %c0_61] : memref<16x32xf32, #tpu.memory_space<vmem>>, vector<16x32xf32>
    %cst_62 = arith.constant dense<0.000000e+00> : vector<8x32xf32>
    %68 = tpu.matmul %66, %67, %cst_62 {dimension_numbers = #tpu.dot_dimension_numbers<[1], [0], [0], [1], [0, 0, 1, 1], [], []>} : vector<8x16xf32>, vector<16x32xf32>, vector<8x32xf32> -> vector<8x32xf32>
    %cst_63 = arith.constant dense<0.000000e+00> : vector<8x32xf32>
    %69 = tpu.matmul %1, %68, %cst_63 {dimension_numbers = #tpu.dot_dimension_numbers<[1], [0], [0], [1], [0, 0, 1, 1], [], []>} : vector<8x8xf32>, vector<8x32xf32>, vector<8x32xf32> -> vector<8x32xf32>
    %cst_64 = arith.constant 0.000000e+00 : f32
    %70 = vector.broadcast %cst_64 : f32 to vector<8x32xf32>
    %71 = arith.maximumf %69, %70 : vector<8x32xf32>
    %72 = arith.addf %71, %23 : vector<8x32xf32>
    %c0_65 = arith.constant 0 : index
    %c0_66 = arith.constant 0 : index
    %73 = vector.load %arg21[%c0_65, %c0_66] : memref<32x8xf32, #tpu.memory_space<vmem>>, vector<32x8xf32>
    %cst_67 = arith.constant dense<0.000000e+00> : vector<8x8xf32>
    %74 = tpu.matmul %72, %73, %cst_67 {dimension_numbers = #tpu.dot_dimension_numbers<[1], [0], [0], [1], [0, 0, 1, 1], [], []>} : vector<8x32xf32>, vector<32x8xf32>, vector<8x8xf32> -> vector<8x8xf32>
    %cst_68 = arith.constant dense<0.000000e+00> : vector<8x8xf32>
    %75 = tpu.matmul %1, %74, %cst_68 {dimension_numbers = #tpu.dot_dimension_numbers<[1], [0], [0], [1], [0, 0, 1, 1], [], []>} : vector<8x8xf32>, vector<8x8xf32>, vector<8x8xf32> -> vector<8x8xf32>
    %cst_69 = arith.constant 0.000000e+00 : f32
    %76 = vector.broadcast %cst_69 : f32 to vector<8x8xf32>
    %77 = arith.maximumf %75, %76 : vector<8x8xf32>
    %78 = arith.addf %77, %28 : vector<8x8xf32>
    %c0_70 = arith.constant 0 : index
    %c0_71 = arith.constant 0 : index
    %79 = vector.load %arg22[%c0_70, %c0_71] : memref<8x8xf32, #tpu.memory_space<vmem>>, vector<8x8xf32>
    %cst_72 = arith.constant dense<0.000000e+00> : vector<8x8xf32>
    %80 = tpu.matmul %78, %79, %cst_72 {dimension_numbers = #tpu.dot_dimension_numbers<[1], [0], [0], [1], [0, 0, 1, 1], [], []>} : vector<8x8xf32>, vector<8x8xf32>, vector<8x8xf32> -> vector<8x8xf32>
    %cst_73 = arith.constant dense<0.000000e+00> : vector<8x8xf32>
    %81 = tpu.matmul %1, %80, %cst_73 {dimension_numbers = #tpu.dot_dimension_numbers<[1], [0], [0], [1], [0, 0, 1, 1], [], []>} : vector<8x8xf32>, vector<8x8xf32>, vector<8x8xf32> -> vector<8x8xf32>
    %cst_74 = arith.constant dense<0.000000e+00> : vector<8x8xf32>
    %82 = tpu.matmul %81, %81, %cst_74 {dimension_numbers = #tpu.dot_dimension_numbers<[1], [1], [0], [0], [0, 0, 1, 0], [], []>} : vector<8x8xf32>, vector<8x8xf32>, vector<8x8xf32> -> vector<8x8xf32>
    %cst_75 = arith.constant 0.000000e+00 : f32
    %83 = vector.broadcast %cst_75 : f32 to vector<8x8xf32>
    %84 = arith.subf %83, %82 : vector<8x8xf32>
    %85 = math.exp %84 : vector<8x8xf32>
    %cst_76 = arith.constant 1.000000e+00 : f32
    %86 = vector.broadcast %cst_76 : f32 to vector<8x8xf32>
    %87 = arith.addf %86, %85 : vector<8x8xf32>
    %88 = tpu.reciprocal %87 {approx = true} : vector<8x8xf32> -> vector<8x8xf32>
    %cst_77 = arith.constant dense<0xFF800000> : vector<8xf32>
    %89 = vector.multi_reduction <maximumf>, %81, %cst_77 [1] : vector<8x8xf32> to vector<8xf32>
    %90 = vector.shape_cast %89 : vector<8xf32> to vector<8x1xf32>
    %91 = vector.broadcast %90 : vector<8x1xf32> to vector<8x8xf32>
    %92 = arith.subf %81, %91 : vector<8x8xf32>
    %93 = math.exp %92 : vector<8x8xf32>
    %cst_78 = arith.constant dense<0.000000e+00> : vector<8xf32>
    %94 = vector.multi_reduction <add>, %93, %cst_78 [1] : vector<8x8xf32> to vector<8xf32>
    %95 = vector.shape_cast %94 : vector<8xf32> to vector<8x1xf32>
    %96 = tpu.reciprocal %95 {approx = true} : vector<8x1xf32> -> vector<8x1xf32>
    %97 = vector.broadcast %96 : vector<8x1xf32> to vector<8x8xf32>
    %98 = arith.mulf %93, %97 : vector<8x8xf32>
    %99 = arith.mulf %2, %2 : vector<4x8xf32>
    %cst_79 = arith.constant dense<0.000000e+00> : vector<4xf32>
    %100 = vector.multi_reduction <add>, %99, %cst_79 [1] : vector<4x8xf32> to vector<4xf32>
    %101 = vector.shape_cast %100 : vector<4xf32> to vector<1x4xf32>
    %102 = arith.mulf %28, %28 : vector<8x8xf32>
    %cst_80 = arith.constant dense<0.000000e+00> : vector<8xf32>
    %103 = vector.multi_reduction <add>, %102, %cst_80 [1] : vector<8x8xf32> to vector<8xf32>
    %104 = vector.shape_cast %103 : vector<8xf32> to vector<8x1xf32>
    %cst_81 = arith.constant dense<0.000000e+00> : vector<8x4xf32>
    %105 = tpu.matmul %28, %2, %cst_81 {dimension_numbers = #tpu.dot_dimension_numbers<[1], [1], [0], [0], [0, 0, 1, 0], [], []>} : vector<8x8xf32>, vector<4x8xf32>, vector<8x4xf32> -> vector<8x4xf32>
    %106 = vector.broadcast %104 : vector<8x1xf32> to vector<8x4xf32>
    %107 = vector.broadcast %101 : vector<1x4xf32> to vector<8x4xf32>
    %108 = arith.addf %106, %107 : vector<8x4xf32>
    %cst_82 = arith.constant 2.000000e+00 : f32
    %109 = vector.broadcast %cst_82 : f32 to vector<8x4xf32>
    %110 = arith.mulf %109, %105 : vector<8x4xf32>
    %111 = arith.subf %108, %110 : vector<8x4xf32>
    %cst_83 = arith.constant 0.000000e+00 : f32
    %112 = vector.broadcast %cst_83 : f32 to vector<8x4xf32>
    %113 = arith.maximumf %111, %112 : vector<8x4xf32>
    %cst_84 = arith.constant 1.000000e+00 : f32
    %114 = vector.broadcast %cst_84 : f32 to vector<8x4xf32>
    %115 = arith.mulf %113, %114 : vector<8x4xf32>
    %cst_85 = arith.constant 1.000000e+00 : f32
    %116 = vector.broadcast %cst_85 : f32 to vector<8x4xf32>
    %117 = arith.addf %116, %115 : vector<8x4xf32>
    %118 = tpu.reciprocal %117 {approx = true} : vector<8x4xf32> -> vector<8x4xf32>
    %cst_86 = arith.constant dense<0.000000e+00> : vector<8xf32>
    %119 = vector.multi_reduction <add>, %118, %cst_86 [1] : vector<8x4xf32> to vector<8xf32>
    %120 = vector.shape_cast %119 : vector<8xf32> to vector<8x1xf32>
    %121 = tpu.reciprocal %120 {approx = true} : vector<8x1xf32> -> vector<8x1xf32>
    %122 = vector.broadcast %121 : vector<8x1xf32> to vector<8x4xf32>
    %123 = arith.mulf %118, %122 : vector<8x4xf32>
    %124 = arith.mulf %81, %81 : vector<8x8xf32>
    %cst_87 = arith.constant dense<0.000000e+00> : vector<8xf32>
    %125 = vector.multi_reduction <add>, %124, %cst_87 [1] : vector<8x8xf32> to vector<8xf32>
    %126 = vector.shape_cast %125 : vector<8xf32> to vector<8x1xf32>
    %cst_88 = arith.constant dense<0.000000e+00> : vector<8x4xf32>
    %127 = tpu.matmul %81, %2, %cst_88 {dimension_numbers = #tpu.dot_dimension_numbers<[1], [1], [0], [0], [0, 0, 1, 0], [], []>} : vector<8x8xf32>, vector<4x8xf32>, vector<8x4xf32> -> vector<8x4xf32>
    %128 = vector.broadcast %126 : vector<8x1xf32> to vector<8x4xf32>
    %129 = vector.broadcast %101 : vector<1x4xf32> to vector<8x4xf32>
    %130 = arith.addf %128, %129 : vector<8x4xf32>
    %cst_89 = arith.constant 2.000000e+00 : f32
    %131 = vector.broadcast %cst_89 : f32 to vector<8x4xf32>
    %132 = arith.mulf %131, %127 : vector<8x4xf32>
    %133 = arith.subf %130, %132 : vector<8x4xf32>
    %cst_90 = arith.constant 0.000000e+00 : f32
    %134 = vector.broadcast %cst_90 : f32 to vector<8x4xf32>
    %135 = arith.maximumf %133, %134 : vector<8x4xf32>
    %cst_91 = arith.constant 1.000000e+00 : f32
    %136 = vector.broadcast %cst_91 : f32 to vector<8x4xf32>
    %137 = arith.mulf %135, %136 : vector<8x4xf32>
    %cst_92 = arith.constant 1.000000e+00 : f32
    %138 = vector.broadcast %cst_92 : f32 to vector<8x4xf32>
    %139 = arith.addf %138, %137 : vector<8x4xf32>
    %140 = tpu.reciprocal %139 {approx = true} : vector<8x4xf32> -> vector<8x4xf32>
    %cst_93 = arith.constant dense<0.000000e+00> : vector<8xf32>
    %141 = vector.multi_reduction <add>, %140, %cst_93 [1] : vector<8x4xf32> to vector<8xf32>
    %142 = vector.shape_cast %141 : vector<8xf32> to vector<8x1xf32>
    %143 = tpu.reciprocal %142 {approx = true} : vector<8x1xf32> -> vector<8x1xf32>
    %144 = vector.broadcast %143 : vector<8x1xf32> to vector<8x4xf32>
    %145 = arith.mulf %140, %144 : vector<8x4xf32>
    %cst_94 = arith.constant 0.000000e+00 : f32
    %146 = vector.broadcast %cst_94 : f32 to vector<8x56xf32>
    %147 = tpu.concatenate %54, %123, %145, %98, %28, %81, %88, %146 in 1 : vector<8x32xf32>, vector<8x4xf32>, vector<8x4xf32>, vector<8x8xf32>, vector<8x8xf32>, vector<8x8xf32>, vector<8x8xf32>, vector<8x56xf32> -> vector<8x128xf32>
    %c0_95 = arith.constant 0 : index
    %c0_96 = arith.constant 0 : index
    %148 = vector.load %arg24[%c0_95, %c0_96] : memref<8x128xf32, #tpu.memory_space<vmem>>, vector<8x128xf32>
    tpu.vector_store %arg24[%c0_95, %c0_96], %147 {strides = array<i32>} : memref<8x128xf32, #tpu.memory_space<vmem>>, vector<8x128xf32>,
    return
  }
}

</mosaic_0001>

<llo_original>
// kernel: tpu_custom_call.1
$region0: #{tpu_custom_call.1}
  #allocation0 [shape = 'u32[]', space=smem, size = 0x4, offset = 0x4, fixed_abs, tag = 'smem constant byte address 0x4 - core index']
  #allocation1 [shape = 'u32[144,128]{1,0:T(1,128)}', space=vmem, size = 0x12000, scoped, tag = 'internal scratch']
  %s0 = inlined_call_operand.hbm [shape: f32[8,32], index: 0, kind: input, shape index: {}]
  %s1 = inlined_call_operand.hbm [shape: f32[8,8], index: 1, kind: input, shape index: {}]
  %s2 = inlined_call_operand.hbm [shape: f32[32,16], index: 2, kind: input, shape index: {}]
  %s3 = inlined_call_operand.hbm [shape: f32[1,16], index: 3, kind: input, shape index: {}]
  %s4 = inlined_call_operand.hbm [shape: f32[16,16], index: 4, kind: input, shape index: {}]
  %s5 = inlined_call_operand.hbm [shape: f32[1,16], index: 5, kind: input, shape index: {}]
  %s6 = inlined_call_operand.hbm [shape: f32[16,32], index: 6, kind: input, shape index: {}]
  %s7 = inlined_call_operand.hbm [shape: f32[1,32], index: 7, kind: input, shape index: {}]
  %s8 = inlined_call_operand.hbm [shape: f32[32,8], index: 8, kind: input, shape index: {}]
  %s9 = inlined_call_operand.hbm [shape: f32[1,8], index: 9, kind: input, shape index: {}]
  %s10 = inlined_call_operand.hbm [shape: f32[8,32], index: 10, kind: input, shape index: {}]
  %s11 = inlined_call_operand.hbm [shape: f32[1,32], index: 11, kind: input, shape index: {}]
  %s12 = inlined_call_operand.hbm [shape: f32[32,16], index: 12, kind: input, shape index: {}]
  %s13 = inlined_call_operand.hbm [shape: f32[1,16], index: 13, kind: input, shape index: {}]
  %s14 = inlined_call_operand.hbm [shape: f32[16,16], index: 14, kind: input, shape index: {}]
  %s15 = inlined_call_operand.hbm [shape: f32[1,16], index: 15, kind: input, shape index: {}]
  %s16 = inlined_call_operand.hbm [shape: f32[16,32], index: 16, kind: input, shape index: {}]
  %s17 = inlined_call_operand.hbm [shape: f32[1,32], index: 17, kind: input, shape index: {}]
  %s18 = inlined_call_operand.hbm [shape: f32[32,16], index: 18, kind: input, shape index: {}]
  %s19 = inlined_call_operand.hbm [shape: f32[16,16], index: 19, kind: input, shape index: {}]
  %s20 = inlined_call_operand.hbm [shape: f32[16,32], index: 20, kind: input, shape index: {}]
  %s21 = inlined_call_operand.hbm [shape: f32[32,8], index: 21, kind: input, shape index: {}]
  %s22 = inlined_call_operand.hbm [shape: f32[8,8], index: 22, kind: input, shape index: {}]
  %s23 = inlined_call_operand.hbm [shape: f32[4,8], index: 23, kind: input, shape index: {}]
  %s24 = inlined_call_operand.hbm [shape: f32[8,128], index: 24, kind: output, shape index: {}]
  %s25 = sld [smem:[#allocation0]]
  $region202: #{tpu_custom_call.1} parent=0
    _
  %s27 = ssub.s32 1, %s25
  %s28 = scalar_select 0, %s27, %s25
  $region1: #{tpu_custom_call.1} parent=0
    #allocation2 [shape = 'u8[4096]{0}', space=vmem, size = 0x1000, scoped, tag = 'input window, operand 0, single buffered']
    #allocation3 [shape = 's32[1]{0}', space=sflag, size = 0x4, scoped, tag = 'scoped memory for tpu_custom_call.1']
    #allocation4 [shape = 's32[1]{0}', space=sflag, size = 0x4, scoped, tag = 'scoped memory for tpu_custom_call.1']
    #allocation5 [shape = 'u8[4096]{0}', space=vmem, size = 0x1000, scoped, tag = 'input window, operand 1, single buffered']
    #allocation6 [shape = 's32[1]{0}', space=sflag, size = 0x4, scoped, tag = 'scoped memory for tpu_custom_call.1']
    #allocation7 [shape = 'u8[16384]{0}', space=vmem, size = 0x4000, scoped, tag = 'input window, operand 2, single buffered']
    #allocation8 [shape = 'u8[512]{0}', space=vmem, size = 0x400, scoped, tag = 'input window, operand 3, single buffered']
    #allocation9 [shape = 's32[1]{0}', space=sflag, size = 0x4, scoped, tag = 'scoped memory for tpu_custom_call.1']
    #allocation10 [shape = 'u8[8192]{0}', space=vmem, size = 0x2000, scoped, tag = 'input window, operand 4, single buffered']
    #allocation11 [shape = 'u8[512]{0}', space=vmem, size = 0x400, scoped, tag = 'input window, operand 5, single buffered']
    #allocation12 [shape = 's32[1]{0}', space=sflag, size = 0x4, scoped, tag = 'scoped memory for tpu_custom_call.1']
    #allocation13 [shape = 'u8[8192]{0}', space=vmem, size = 0x2000, scoped, tag = 'input window, operand 6, single buffered']
    #allocation14 [shape = 'u8[512]{0}', space=vmem, size = 0x400, scoped, tag = 'input window, operand 7, single buffered']
    #allocation15 [shape = 's32[1]{0}', space=sflag, size = 0x4, scoped, tag = 'scoped memory for tpu_custom_call.1']
    #allocation16 [shape = 'u8[16384]{0}', space=vmem, size = 0x4000, scoped, tag = 'input window, operand 8, single buffered']
    #allocation17 [shape = 'u8[512]{0}', space=vmem, size = 0x400, scoped, tag = 'input window, operand 9, single buffered']
    #allocation18 [shape = 's32[1]{0}', space=sflag, size = 0x4, scoped, tag = 'scoped memory for tpu_custom_call.1']
    #allocation19 [shape = 'u8[4096]{0}', space=vmem, size = 0x1000, scoped, tag = 'input window, operand 10, single buffered']
    #allocation20 [shape = 'u8[512]{0}', space=vmem, size = 0x400, scoped, tag = 'input window, operand 11, single buffered']
    #allocation21 [shape = 's32[1]{0}', space=sflag, size = 0x4, scoped, tag = 'scoped memory for tpu_custom_call.1']
    #allocation22 [shape = 'u8[16384]{0}', space=vmem, size = 0x4000, scoped, tag = 'input window, operand 12, single buffered']
    #allocation23 [shape = 'u8[512]{0}', space=vmem, size = 0x400, scoped, tag = 'input window, operand 13, single buffered']
    #allocation24 [shape = 's32[1]{0}', space=sflag, size = 0x4, scoped, tag = 'scoped memory for tpu_custom_call.1']
    #allocation25 [shape = 'u8[8192]{0}', space=vmem, size = 0x2000, scoped, tag = 'input window, operand 14, single buffered']
    #allocation26 [shape = 'u8[512]{0}', space=vmem, size = 0x400, scoped, tag = 'input window, operand 15, single buffered']
    #allocation27 [shape = 's32[1]{0}', space=sflag, size = 0x4, scoped, tag = 'scoped memory for tpu_custom_call.1']
    #allocation28 [shape = 'u8[8192]{0}', space=vmem, size = 0x2000, scoped, tag = 'input window, operand 16, single buffered']
    #allocation29 [shape = 'u8[512]{0}', space=vmem, size = 0x400, scoped, tag = 'input window, operand 17, single buffered']
    #allocation30 [shape = 's32[1]{0}', space=sflag, size = 0x4, scoped, tag = 'scoped memory for tpu_custom_call.1']
    #allocation31 [shape = 'u8[16384]{0}', space=vmem, size = 0x4000, scoped, tag = 'input window, operand 18, single buffered']
    #allocation32 [shape = 'u8[8192]{0}', space=vmem, size = 0x2000, scoped, tag = 'input window, operand 19, single buffered']
    #allocation33 [shape = 's32[1]{0}', space=sflag, size = 0x4, scoped, tag = 'scoped memory for tpu_custom_call.1']
    #allocation34 [shape = 'u8[8192]{0}', space=vmem, size = 0x2000, scoped, tag = 'input window, operand 20, single buffered']
    #allocation35 [shape = 'u8[16384]{0}', space=vmem, size = 0x4000, scoped, tag = 'input window, operand 21, single buffered']
    #allocation36 [shape = 's32[1]{0}', space=sflag, size = 0x4, scoped, tag = 'scoped memory for tpu_custom_call.1']
    #allocation37 [shape = 'u8[4096]{0}', space=vmem, size = 0x1000, scoped, tag = 'input window, operand 22, single buffered']
    #allocation38 [shape = 'u8[2048]{0}', space=vmem, size = 0x800, scoped, tag = 'input window, operand 23, single buffered']
    #allocation39 [shape = 's32[1]{0}', space=sflag, size = 0x4, scoped, tag = 'scoped memory for tpu_custom_call.1']
    #allocation40 [shape = 'u8[4096]{0}', space=vmem, size = 0x1000, scoped, tag = 'output window, operand 0, single buffered']
    %29 = vsyncpa [#allocation3], 0
    %30 = vsyncpa [#allocation6], 0
    %31 = vsyncpa [#allocation9], 0
    %32 = vsyncpa [#allocation12], 0
    %33 = vsyncpa [#allocation15], 0
    %34 = vsyncpa [#allocation18], 0
    %35 = vsyncpa [#allocation21], 0
    %36 = vsyncpa [#allocation24], 0
    %37 = vsyncpa [#allocation27], 0
    %38 = vsyncpa [#allocation30], 0
    %39 = vsyncpa [#allocation33], 0
    %40 = vsyncpa [#allocation36], 0
    %41 = vsyncpa [#allocation39], 0
    %42 = vsyncpa [#allocation4], 0
    // Predicated region
    $region2: #{tpu_custom_call.1} parent=1 // pred_check
      _
    $region3: #{tpu_custom_call.1} parent=1 // pred_check_branch
      %44 = sbr.rel (0) target = $region5
    $region4: #{tpu_custom_call.1} parent=1 // pred_region
      %s46 = ssub.s32 128, 128
      %47 = vsyncadd [#allocation3], %s46
      %s49 = sshll.u32 [#allocation2], 4
      %s50 = int_to_ptr.vmem [resolvable:$true] %s49
      %52 = dma.hbm_to_vmem [thread:$0]  %s0, 128, %s50, [#allocation3]
    $region5: #{tpu_custom_call.1} parent=1 // pred_fallthru
      _
    // Predicated region
    $region6: #{tpu_custom_call.1} parent=1 // pred_check
      _
    $region7: #{tpu_custom_call.1} parent=1 // pred_check_branch
      %54 = sbr.rel (0) target = $region9
    $region8: #{tpu_custom_call.1} parent=1 // pred_region
      %s56 = ssub.s32 128, 128
      %57 = vsyncadd [#allocation6], %s56
      %s59 = sshll.u32 [#allocation5], 4
      %s60 = int_to_ptr.vmem [resolvable:$true] %s59
      %62 = dma.hbm_to_vmem [thread:$0]  %s1, 128, %s60, [#allocation6]
    $region9: #{tpu_custom_call.1} parent=1 // pred_fallthru
      _
    // Predicated region
    $region10: #{tpu_custom_call.1} parent=1 // pred_check
      _
    $region11: #{tpu_custom_call.1} parent=1 // pred_check_branch
      %64 = sbr.rel (0) target = $region13
    $region12: #{tpu_custom_call.1} parent=1 // pred_region
      %s66 = ssub.s32 512, 512
      %67 = vsyncadd [#allocation6], %s66
      %s68 = sshll.u32 [#allocation7], 4
      %s69 = int_to_ptr.vmem [resolvable:$true] %s68
      %74 = dma.hbm_to_vmem [thread:$0]  %s2, 512, %s69, [#allocation6], 128, 128, 8
    $region13: #{tpu_custom_call.1} parent=1 // pred_fallthru
      _
    // Predicated region
    $region14: #{tpu_custom_call.1} parent=1 // pred_check
      _
    $region15: #{tpu_custom_call.1} parent=1 // pred_check_branch
      %76 = sbr.rel (0) target = $region17
    $region16: #{tpu_custom_call.1} parent=1 // pred_region
      %s78 = ssub.s32 16, 16
      %79 = vsyncadd [#allocation9], %s78
      %s81 = sshll.u32 [#allocation8], 4
      %s82 = int_to_ptr.vmem [resolvable:$true] %s81
      %84 = dma.hbm_to_vmem [thread:$0]  %s3, 16, %s82, [#allocation9]
    $region17: #{tpu_custom_call.1} parent=1 // pred_fallthru
      _
    // Predicated region
    $region18: #{tpu_custom_call.1} parent=1 // pred_check
      _
    $region19: #{tpu_custom_call.1} parent=1 // pred_check_branch
      %86 = sbr.rel (0) target = $region21
    $region20: #{tpu_custom_call.1} parent=1 // pred_region
      %s88 = ssub.s32 256, 256
      %89 = vsyncadd [#allocation9], %s88
      %s90 = sshll.u32 [#allocation10], 4
      %s91 = int_to_ptr.vmem [resolvable:$true] %s90
      %96 = dma.hbm_to_vmem [thread:$0]  %s4, 256, %s91, [#allocation9], 128, 128, 8
    $region21: #{tpu_custom_call.1} parent=1 // pred_fallthru
      _
    // Predicated region
    $region22: #{tpu_custom_call.1} parent=1 // pred_check
      _
    $region23: #{tpu_custom_call.1} parent=1 // pred_check_branch
      %98 = sbr.rel (0) target = $region25
    $region24: #{tpu_custom_call.1} parent=1 // pred_region
      %s100 = ssub.s32 16, 16
      %101 = vsyncadd [#allocation12], %s100
      %s103 = sshll.u32 [#allocation11], 4
      %s104 = int_to_ptr.vmem [resolvable:$true] %s103
      %106 = dma.hbm_to_vmem [thread:$0]  %s5, 16, %s104, [#allocation12]
    $region25: #{tpu_custom_call.1} parent=1 // pred_fallthru
      _
    // Predicated region
    $region26: #{tpu_custom_call.1} parent=1 // pred_check
      _
    $region27: #{tpu_custom_call.1} parent=1 // pred_check_branch
      %108 = sbr.rel (0) target = $region29
    $region28: #{tpu_custom_call.1} parent=1 // pred_region
      %s110 = ssub.s32 256, 256
      %111 = vsyncadd [#allocation12], %s110
      %s112 = sshll.u32 [#allocation13], 4
      %s113 = int_to_ptr.vmem [resolvable:$true] %s112
      %118 = dma.hbm_to_vmem [thread:$0]  %s6, 256, %s113, [#allocation12], 128, 128, 8
    $region29: #{tpu_custom_call.1} parent=1 // pred_fallthru
      _
    // Predicated region
    $region30: #{tpu_custom_call.1} parent=1 // pred_check
      _
    $region31: #{tpu_custom_call.1} parent=1 // pred_check_branch
      %120 = sbr.rel (0) target = $region33
    $region32: #{tpu_custom_call.1} parent=1 // pred_region
      %s122 = ssub.s32 16, 16
      %123 = vsyncadd [#allocation15], %s122
      %s125 = sshll.u32 [#allocation14], 4
      %s126 = int_to_ptr.vmem [resolvable:$true] %s125
      %128 = dma.hbm_to_vmem [thread:$0]  %s7, 16, %s126, [#allocation15]
    $region33: #{tpu_custom_call.1} parent=1 // pred_fallthru
      _
    // Predicated region
    $region34: #{tpu_custom_call.1} parent=1 // pred_check
      _
    $region35: #{tpu_custom_call.1} parent=1 // pred_check_branch
      %130 = sbr.rel (0) target = $region37
    $region36: #{tpu_custom_call.1} parent=1 // pred_region
      %s132 = ssub.s32 512, 512
      %133 = vsyncadd [#allocation15], %s132
      %s134 = sshll.u32 [#allocation16], 4
      %s135 = int_to_ptr.vmem [resolvable:$true] %s134
      %140 = dma.hbm_to_vmem [thread:$0]  %s8, 512, %s135, [#allocation15], 128, 128, 8
    $region37: #{tpu_custom_call.1} parent=1 // pred_fallthru
      _
    // Predicated region
    $region38: #{tpu_custom_call.1} parent=1 // pred_check
      _
    $region39: #{tpu_custom_call.1} parent=1 // pred_check_branch
      %142 = sbr.rel (0) target = $region41
    $region40: #{tpu_custom_call.1} parent=1 // pred_region
      %s144 = ssub.s32 16, 16
      %145 = vsyncadd [#allocation18], %s144
      %s147 = sshll.u32 [#allocation17], 4
      %s148 = int_to_ptr.vmem [resolvable:$true] %s147
      %150 = dma.hbm_to_vmem [thread:$0]  %s9, 16, %s148, [#allocation18]
    $region41: #{tpu_custom_call.1} parent=1 // pred_fallthru
      _
    // Predicated region
    $region42: #{tpu_custom_call.1} parent=1 // pred_check
      _
    $region43: #{tpu_custom_call.1} parent=1 // pred_check_branch
      %152 = sbr.rel (0) target = $region45
    $region44: #{tpu_custom_call.1} parent=1 // pred_region
      %s154 = ssub.s32 128, 128
      %155 = vsyncadd [#allocation18], %s154
      %s157 = sshll.u32 [#allocation19], 4
      %s158 = int_to_ptr.vmem [resolvable:$true] %s157
      %160 = dma.hbm_to_vmem [thread:$0]  %s10, 128, %s158, [#allocation18]
    $region45: #{tpu_custom_call.1} parent=1 // pred_fallthru
      _
    // Predicated region
    $region46: #{tpu_custom_call.1} parent=1 // pred_check
      _
    $region47: #{tpu_custom_call.1} parent=1 // pred_check_branch
      %162 = sbr.rel (0) target = $region49
    $region48: #{tpu_custom_call.1} parent=1 // pred_region
      %s164 = ssub.s32 16, 16
      %165 = vsyncadd [#allocation21], %s164
      %s167 = sshll.u32 [#allocation20], 4
      %s168 = int_to_ptr.vmem [resolvable:$true] %s167
      %170 = dma.hbm_to_vmem [thread:$0]  %s11, 16, %s168, [#allocation21]
    $region49: #{tpu_custom_call.1} parent=1 // pred_fallthru
      _
    // Predicated region
    $region50: #{tpu_custom_call.1} parent=1 // pred_check
      _
    $region51: #{tpu_custom_call.1} parent=1 // pred_check_branch
      %172 = sbr.rel (0) target = $region53
    $region52: #{tpu_custom_call.1} parent=1 // pred_region
      %s174 = ssub.s32 512, 512
      %175 = vsyncadd [#allocation21], %s174
      %s176 = sshll.u32 [#allocation22], 4
      %s177 = int_to_ptr.vmem [resolvable:$true] %s176
      %182 = dma.hbm_to_vmem [thread:$0]  %s12, 512, %s177, [#allocation21], 128, 128, 8
    $region53: #{tpu_custom_call.1} parent=1 // pred_fallthru
      _
    // Predicated region
    $region54: #{tpu_custom_call.1} parent=1 // pred_check
      _
    $region55: #{tpu_custom_call.1} parent=1 // pred_check_branch
      %184 = sbr.rel (0) target = $region57
    $region56: #{tpu_custom_call.1} parent=1 // pred_region
      %s186 = ssub.s32 16, 16
      %187 = vsyncadd [#allocation24], %s186
      %s189 = sshll.u32 [#allocation23], 4
      %s190 = int_to_ptr.vmem [resolvable:$true] %s189
      %192 = dma.hbm_to_vmem [thread:$0]  %s13, 16, %s190, [#allocation24]
    $region57: #{tpu_custom_call.1} parent=1 // pred_fallthru
      _
    // Predicated region
    $region58: #{tpu_custom_call.1} parent=1 // pred_check
      _
    $region59: #{tpu_custom_call.1} parent=1 // pred_check_branch
      %194 = sbr.rel (0) target = $region61
    $region60: #{tpu_custom_call.1} parent=1 // pred_region
      %s196 = ssub.s32 256, 256
      %197 = vsyncadd [#allocation24], %s196
      %s198 = sshll.u32 [#allocation25], 4
      %s199 = int_to_ptr.vmem [resolvable:$true] %s198
      %204 = dma.hbm_to_vmem [thread:$0]  %s14, 256, %s199, [#allocation24], 128, 128, 8
    $region61: #{tpu_custom_call.1} parent=1 // pred_fallthru
      _
    // Predicated region
    $region62: #{tpu_custom_call.1} parent=1 // pred_check
      _
    $region63: #{tpu_custom_call.1} parent=1 // pred_check_branch
      %206 = sbr.rel (0) target = $region65
    $region64: #{tpu_custom_call.1} parent=1 // pred_region
      %s208 = ssub.s32 16, 16
      %209 = vsyncadd [#allocation27], %s208
      %s211 = sshll.u32 [#allocation26], 4
      %s212 = int_to_ptr.vmem [resolvable:$true] %s211
      %214 = dma.hbm_to_vmem [thread:$0]  %s15, 16, %s212, [#allocation27]
    $region65: #{tpu_custom_call.1} parent=1 // pred_fallthru
      _
    // Predicated region
    $region66: #{tpu_custom_call.1} parent=1 // pred_check
      _
    $region67: #{tpu_custom_call.1} parent=1 // pred_check_branch
      %216 = sbr.rel (0) target = $region69
    $region68: #{tpu_custom_call.1} parent=1 // pred_region
      %s218 = ssub.s32 256, 256
      %219 = vsyncadd [#allocation27], %s218
      %s220 = sshll.u32 [#allocation28], 4
      %s221 = int_to_ptr.vmem [resolvable:$true] %s220
      %226 = dma.hbm_to_vmem [thread:$0]  %s16, 256, %s221, [#allocation27], 128, 128, 8
    $region69: #{tpu_custom_call.1} parent=1 // pred_fallthru
      _
    // Predicated region
    $region70: #{tpu_custom_call.1} parent=1 // pred_check
      _
    $region71: #{tpu_custom_call.1} parent=1 // pred_check_branch
      %228 = sbr.rel (0) target = $region73
    $region72: #{tpu_custom_call.1} parent=1 // pred_region
      %s230 = ssub.s32 16, 16
      %231 = vsyncadd [#allocation30], %s230
      %s233 = sshll.u32 [#allocation29], 4
      %s234 = int_to_ptr.vmem [resolvable:$true] %s233
      %236 = dma.hbm_to_vmem [thread:$0]  %s17, 16, %s234, [#allocation30]
    $region73: #{tpu_custom_call.1} parent=1 // pred_fallthru
      _
    // Predicated region
    $region74: #{tpu_custom_call.1} parent=1 // pred_check
      _
    $region75: #{tpu_custom_call.1} parent=1 // pred_check_branch
      %238 = sbr.rel (0) target = $region77
    $region76: #{tpu_custom_call.1} parent=1 // pred_region
      %s240 = ssub.s32 512, 512
      %241 = vsyncadd [#allocation30], %s240
      %s242 = sshll.u32 [#allocation31], 4
      %s243 = int_to_ptr.vmem [resolvable:$true] %s242
      %248 = dma.hbm_to_vmem [thread:$0]  %s18, 512, %s243, [#allocation30], 128, 128, 8
    $region77: #{tpu_custom_call.1} parent=1 // pred_fallthru
      _
    // Predicated region
    $region78: #{tpu_custom_call.1} parent=1 // pred_check
      _
    $region79: #{tpu_custom_call.1} parent=1 // pred_check_branch
      %250 = sbr.rel (0) target = $region81
    $region80: #{tpu_custom_call.1} parent=1 // pred_region
      %s252 = ssub.s32 256, 256
      %253 = vsyncadd [#allocation33], %s252
      %s254 = sshll.u32 [#allocation32], 4
      %s255 = int_to_ptr.vmem [resolvable:$true] %s254
      %260 = dma.hbm_to_vmem [thread:$0]  %s19, 256, %s255, [#allocation33], 128, 128, 8
    $region81: #{tpu_custom_call.1} parent=1 // pred_fallthru
      _
    // Predicated region
    $region82: #{tpu_custom_call.1} parent=1 // pred_check
      _
    $region83: #{tpu_custom_call.1} parent=1 // pred_check_branch
      %262 = sbr.rel (0) target = $region85
    $region84: #{tpu_custom_call.1} parent=1 // pred_region
      %s264 = ssub.s32 256, 256
      %265 = vsyncadd [#allocation33], %s264
      %s266 = sshll.u32 [#allocation34], 4
      %s267 = int_to_ptr.vmem [resolvable:$true] %s266
      %272 = dma.hbm_to_vmem [thread:$0]  %s20, 256, %s267, [#allocation33], 128, 128, 8
    $region85: #{tpu_custom_call.1} parent=1 // pred_fallthru
      _
    // Predicated region
    $region86: #{tpu_custom_call.1} parent=1 // pred_check
      _
    $region87: #{tpu_custom_call.1} parent=1 // pred_check_branch
      %274 = sbr.rel (0) target = $region89
    $region88: #{tpu_custom_call.1} parent=1 // pred_region
      %s276 = ssub.s32 512, 512
      %277 = vsyncadd [#allocation36], %s276
      %s278 = sshll.u32 [#allocation35], 4
      %s279 = int_to_ptr.vmem [resolvable:$true] %s278
      %284 = dma.hbm_to_vmem [thread:$0]  %s21, 512, %s279, [#allocation36], 128, 128, 8
    $region89: #{tpu_custom_call.1} parent=1 // pred_fallthru
      _
    // Predicated region
    $region90: #{tpu_custom_call.1} parent=1 // pred_check
      _
    $region91: #{tpu_custom_call.1} parent=1 // pred_check_branch
      %286 = sbr.rel (0) target = $region93
    $region92: #{tpu_custom_call.1} parent=1 // pred_region
      %s288 = ssub.s32 128, 128
      %289 = vsyncadd [#allocation36], %s288
      %s291 = sshll.u32 [#allocation37], 4
      %s292 = int_to_ptr.vmem [resolvable:$true] %s291
      %294 = dma.hbm_to_vmem [thread:$0]  %s22, 128, %s292, [#allocation36]
    $region93: #{tpu_custom_call.1} parent=1 // pred_fallthru
      _
    // Predicated region
    $region94: #{tpu_custom_call.1} parent=1 // pred_check
      _
    $region95: #{tpu_custom_call.1} parent=1 // pred_check_branch
      %296 = sbr.rel (0) target = $region97
    $region96: #{tpu_custom_call.1} parent=1 // pred_region
      %s298 = ssub.s32 64, 64
      %299 = vsyncadd [#allocation39], %s298
      %s301 = sshll.u32 [#allocation38], 4
      %s302 = int_to_ptr.vmem [resolvable:$true] %s301
      %304 = dma.hbm_to_vmem [thread:$0]  %s23, 64, %s302, [#allocation39]
    $region97: #{tpu_custom_call.1} parent=1 // pred_fallthru
      _
    // Predicated region
    $region98: #{tpu_custom_call.1} parent=1 // pred_check
      _
    $region99: #{tpu_custom_call.1} parent=1 // pred_check_branch
      %306 = sbr.rel (0) target = $region101
    $region100: #{tpu_custom_call.1} parent=1 // pred_region
      %307 = dma.done [#allocation3], 128
    $region101: #{tpu_custom_call.1} parent=1 // pred_fallthru
      _
    // Predicated region
    $region102: #{tpu_custom_call.1} parent=1 // pred_check
      _
    $region103: #{tpu_custom_call.1} parent=1 // pred_check_branch
      %309 = sbr.rel (0) target = $region105
    $region104: #{tpu_custom_call.1} parent=1 // pred_region
      %310 = dma.done [#allocation6], 128
    $region105: #{tpu_custom_call.1} parent=1 // pred_fallthru
      _
    // Predicated region
    $region106: #{tpu_custom_call.1} parent=1 // pred_check
      _
    $region107: #{tpu_custom_call.1} parent=1 // pred_check_branch
      %312 = sbr.rel (0) target = $region109
    $region108: #{tpu_custom_call.1} parent=1 // pred_region
      %313 = dma.done [#allocation6], 512
    $region109: #{tpu_custom_call.1} parent=1 // pred_fallthru
      _
    // Predicated region
    $region110: #{tpu_custom_call.1} parent=1 // pred_check
      _
    $region111: #{tpu_custom_call.1} parent=1 // pred_check_branch
      %315 = sbr.rel (0) target = $region113
    $region112: #{tpu_custom_call.1} parent=1 // pred_region
      %316 = dma.done [#allocation9], 16
    $region113: #{tpu_custom_call.1} parent=1 // pred_fallthru
      _
    // Predicated region
    $region114: #{tpu_custom_call.1} parent=1 // pred_check
      _
    $region115: #{tpu_custom_call.1} parent=1 // pred_check_branch
      %318 = sbr.rel (0) target = $region117
    $region116: #{tpu_custom_call.1} parent=1 // pred_region
      %319 = dma.done [#allocation9], 256
    $region117: #{tpu_custom_call.1} parent=1 // pred_fallthru
      _
    // Predicated region
    $region118: #{tpu_custom_call.1} parent=1 // pred_check
      _
    $region119: #{tpu_custom_call.1} parent=1 // pred_check_branch
      %321 = sbr.rel (0) target = $region121
    $region120: #{tpu_custom_call.1} parent=1 // pred_region
      %322 = dma.done [#allocation12], 16
    $region121: #{tpu_custom_call.1} parent=1 // pred_fallthru
      _
    // Predicated region
    $region122: #{tpu_custom_call.1} parent=1 // pred_check
      _
    $region123: #{tpu_custom_call.1} parent=1 // pred_check_branch
      %324 = sbr.rel (0) target = $region125
    $region124: #{tpu_custom_call.1} parent=1 // pred_region
      %325 = dma.done [#allocation12], 256
    $region125: #{tpu_custom_call.1} parent=1 // pred_fallthru
      _
    // Predicated region
    $region126: #{tpu_custom_call.1} parent=1 // pred_check
      _
    $region127: #{tpu_custom_call.1} parent=1 // pred_check_branch
      %327 = sbr.rel (0) target = $region129
    $region128: #{tpu_custom_call.1} parent=1 // pred_region
      %328 = dma.done [#allocation15], 16
    $region129: #{tpu_custom_call.1} parent=1 // pred_fallthru
      _
    // Predicated region
    $region130: #{tpu_custom_call.1} parent=1 // pred_check
      _
    $region131: #{tpu_custom_call.1} parent=1 // pred_check_branch
      %330 = sbr.rel (0) target = $region133
    $region132: #{tpu_custom_call.1} parent=1 // pred_region
      %331 = dma.done [#allocation15], 512
    $region133: #{tpu_custom_call.1} parent=1 // pred_fallthru
      _
    // Predicated region
    $region134: #{tpu_custom_call.1} parent=1 // pred_check
      _
    $region135: #{tpu_custom_call.1} parent=1 // pred_check_branch
      %333 = sbr.rel (0) target = $region137
    $region136: #{tpu_custom_call.1} parent=1 // pred_region
      %334 = dma.done [#allocation18], 16
    $region137: #{tpu_custom_call.1} parent=1 // pred_fallthru
      _
    // Predicated region
    $region138: #{tpu_custom_call.1} parent=1 // pred_check
      _
    $region139: #{tpu_custom_call.1} parent=1 // pred_check_branch
      %336 = sbr.rel (0) target = $region141
    $region140: #{tpu_custom_call.1} parent=1 // pred_region
      %337 = dma.done [#allocation18], 128
    $region141: #{tpu_custom_call.1} parent=1 // pred_fallthru
      _
    // Predicated region
    $region142: #{tpu_custom_call.1} parent=1 // pred_check
      _
    $region143: #{tpu_custom_call.1} parent=1 // pred_check_branch
      %339 = sbr.rel (0) target = $region145
    $region144: #{tpu_custom_call.1} parent=1 // pred_region
      %340 = dma.done [#allocation21], 16
    $region145: #{tpu_custom_call.1} parent=1 // pred_fallthru
      _
    // Predicated region
    $region146: #{tpu_custom_call.1} parent=1 // pred_check
      _
    $region147: #{tpu_custom_call.1} parent=1 // pred_check_branch
      %342 = sbr.rel (0) target = $region149
    $region148: #{tpu_custom_call.1} parent=1 // pred_region
      %343 = dma.done [#allocation21], 512
    $region149: #{tpu_custom_call.1} parent=1 // pred_fallthru
      _
    // Predicated region
    $region150: #{tpu_custom_call.1} parent=1 // pred_check
      _
    $region151: #{tpu_custom_call.1} parent=1 // pred_check_branch
      %345 = sbr.rel (0) target = $region153
    $region152: #{tpu_custom_call.1} parent=1 // pred_region
      %346 = dma.done [#allocation24], 16
    $region153: #{tpu_custom_call.1} parent=1 // pred_fallthru
      _
    // Predicated region
    $region154: #{tpu_custom_call.1} parent=1 // pred_check
      _
    $region155: #{tpu_custom_call.1} parent=1 // pred_check_branch
      %348 = sbr.rel (0) target = $region157
    $region156: #{tpu_custom_call.1} parent=1 // pred_region
      %349 = dma.done [#allocation24], 256
    $region157: #{tpu_custom_call.1} parent=1 // pred_fallthru
      _
    // Predicated region
    $region158: #{tpu_custom_call.1} parent=1 // pred_check
      _
    $region159: #{tpu_custom_call.1} parent=1 // pred_check_branch
      %351 = sbr.rel (0) target = $region161
    $region160: #{tpu_custom_call.1} parent=1 // pred_region
      %352 = dma.done [#allocation27], 16
    $region161: #{tpu_custom_call.1} parent=1 // pred_fallthru
      _
    // Predicated region
    $region162: #{tpu_custom_call.1} parent=1 // pred_check
      _
    $region163: #{tpu_custom_call.1} parent=1 // pred_check_branch
      %354 = sbr.rel (0) target = $region165
    $region164: #{tpu_custom_call.1} parent=1 // pred_region
      %355 = dma.done [#allocation27], 256
    $region165: #{tpu_custom_call.1} parent=1 // pred_fallthru
      _
    // Predicated region
    $region166: #{tpu_custom_call.1} parent=1 // pred_check
      _
    $region167: #{tpu_custom_call.1} parent=1 // pred_check_branch
      %357 = sbr.rel (0) target = $region169
    $region168: #{tpu_custom_call.1} parent=1 // pred_region
      %358 = dma.done [#allocation30], 16
    $region169: #{tpu_custom_call.1} parent=1 // pred_fallthru
      _
    // Predicated region
    $region170: #{tpu_custom_call.1} parent=1 // pred_check
      _
    $region171: #{tpu_custom_call.1} parent=1 // pred_check_branch
      %360 = sbr.rel (0) target = $region173
    $region172: #{tpu_custom_call.1} parent=1 // pred_region
      %361 = dma.done [#allocation30], 512
    $region173: #{tpu_custom_call.1} parent=1 // pred_fallthru
      _
    // Predicated region
    $region174: #{tpu_custom_call.1} parent=1 // pred_check
      _
    $region175: #{tpu_custom_call.1} parent=1 // pred_check_branch
      %363 = sbr.rel (0) target = $region177
    $region176: #{tpu_custom_call.1} parent=1 // pred_region
      %364 = dma.done [#allocation33], 256
    $region177: #{tpu_custom_call.1} parent=1 // pred_fallthru
      _
    // Predicated region
    $region178: #{tpu_custom_call.1} parent=1 // pred_check
      _
    $region179: #{tpu_custom_call.1} parent=1 // pred_check_branch
      %366 = sbr.rel (0) target = $region181
    $region180: #{tpu_custom_call.1} parent=1 // pred_region
      %367 = dma.done [#allocation33], 256
    $region181: #{tpu_custom_call.1} parent=1 // pred_fallthru
      _
    // Predicated region
    $region182: #{tpu_custom_call.1} parent=1 // pred_check
      _
    $region183: #{tpu_custom_call.1} parent=1 // pred_check_branch
      %369 = sbr.rel (0) target = $region185
    $region184: #{tpu_custom_call.1} parent=1 // pred_region
      %370 = dma.done [#allocation36], 512
    $region185: #{tpu_custom_call.1} parent=1 // pred_fallthru
      _
    // Predicated region
    $region186: #{tpu_custom_call.1} parent=1 // pred_check
      _
    $region187: #{tpu_custom_call.1} parent=1 // pred_check_branch
      %372 = sbr.rel (0) target = $region189
    $region188: #{tpu_custom_call.1} parent=1 // pred_region
      %373 = dma.done [#allocation36], 128
    $region189: #{tpu_custom_call.1} parent=1 // pred_fallthru
      _
    // Predicated region
    $region190: #{tpu_custom_call.1} parent=1 // pred_check
      _
    $region191: #{tpu_custom_call.1} parent=1 // pred_check_branch
      %375 = sbr.rel (0) target = $region193
    $region192: #{tpu_custom_call.1} parent=1 // pred_region
      %376 = dma.done [#allocation39], 64
    $region193: #{tpu_custom_call.1} parent=1 // pred_fallthru
      _
    %v377 = vld [vmem:[#allocation2] sm:$0xff]
    %v378 = vld [vmem:[#allocation5] sm:$0xff]
    %v379 = vld [vmem:[#allocation38] sm:$0xf]
    %v380 = vld [vmem:[#allocation7] sm:$0xff]
    %v381 = vld [vmem:[#allocation7 + $0x8] sm:$0xff]
    %v382 = vld [vmem:[#allocation7 + $0x10] sm:$0xff]
    %v383 = vld [vmem:[#allocation7 + $0x18] sm:$0xff]
    %v384 = vld [vmem:[#allocation8] sm:$0x1]
    %v386 = vlaneseq
    %v387 = vshrl.u32 %v386, 7
    %v388 = vsub.s32 0, %v387
    %v389 = vrot.slane %v384, %v388
    %vm391 = vcmask 261120
    %v393 = vsel %vm391, %v377, 0
    %395 = vmatprep.subr.mxu0 0.0
    %396 = vmatpush1.msra.mxu0 %v380
    %397 = vmatprep.subr.mxu0 0.0
    %398 = vmatpush1.msra.mxu0 %v381
    %399 = vmatprep.subr.mxu0 0.0
    %400 = vmatpush1.msra.mxu0 %v382
    %401 = vmatprep.subr.mxu0 0.0
    %402 = vmatpush1.msra.mxu0 %v383
    %403 = vmatprep.subr.mxu0 0.0
    %404 = vmatpush1.msra.mxu0 0.0
    %405 = vmatprep.subr.mxu0 0.0
    %406 = vmatpush1.msra.mxu0 0.0
    %407 = vmatprep.subr.mxu0 0.0
    %408 = vmatpush1.msra.mxu0 0.0
    %409 = vmatprep.subr.mxu0 0.0
    %410 = vmatpush1.msra.mxu0 0.0
    %411 = vmatprep.subr.mxu0 0.0
    %412 = vmatpush1.msra.mxu0 0.0
    %413 = vmatprep.subr.mxu0 0.0
    %414 = vmatpush1.msra.mxu0 0.0
    %415 = vmatprep.subr.mxu0 0.0
    %416 = vmatpush1.msra.mxu0 0.0
    %417 = vmatprep.subr.mxu0 0.0
    %418 = vmatpush1.msra.mxu0 0.0
    %419 = vmatprep.subr.mxu0 0.0
    %420 = vmatpush1.msra.mxu0 0.0
    %421 = vmatprep.subr.mxu0 0.0
    %422 = vmatpush1.msra.mxu0 0.0
    %423 = vmatprep.subr.mxu0 0.0
    %424 = vmatpush1.msra.mxu0 0.0
    %425 = vmatprep.subr.mxu0 0.0
    %426 = vmatpush1.msra.mxu0 0.0
    %427 = vmatprep.subr.mxu0 0.0
    %428 = vmatpush1.msra.mxu0 0.0
    %429 = vmatprep.subr.mxu0 0.0
    %430 = vmatpush1.msra.mxu0 0.0
    %431 = vmatprep.subr.mxu0 0.0
    %432 = vmatpush1.msra.mxu0 0.0
    %433 = vmatprep.subr.mxu0 0.0
    %434 = vmatpush1.msra.mxu0 0.0
    %435 = vmatprep.subr.mxu0 0.0
    %436 = vmatpush1.msra.mxu0 0.0
    %437 = vmatprep.subr.mxu0 0.0
    %438 = vmatpush1.msra.mxu0 0.0
    %439 = vmatprep.subr.mxu0 0.0
    %440 = vmatpush1.msra.mxu0 0.0
    %441 = vmatprep.subr.mxu0 0.0
    %442 = vmatpush1.msra.mxu0 0.0
    %443 = vmatprep.subr.mxu0 0.0
    %444 = vmatpush1.msra.mxu0 0.0
    %445 = vmatprep.subr.mxu0 0.0
    %446 = vmatpush1.msra.mxu0 0.0
    %447 = vmatprep.subr.mxu0 0.0
    %448 = vmatpush1.msra.mxu0 0.0
    %449 = vmatprep.subr.mxu0 0.0
    %450 = vmatpush1.msra.mxu0 0.0
    %451 = vmatprep.subr.mxu0 0.0
    %452 = vmatpush1.msra.mxu0 0.0
    %453 = vmatprep.subr.mxu0 0.0
    %454 = vmatpush1.msra.mxu0 0.0
    %455 = vmatprep.subr.mxu0 0.0
    %456 = vmatpush1.msra.mxu0 0.0
    %457 = vmatprep.subr.mxu0 0.0
    %458 = vmatpush1.msra.mxu0 0.0
    %459 = vmatprep.mubr.f32.mxu0 0.0
    %460 = vmatmul.mubr.f32.gmra.mrb[0].mxu0 %v393
    %v461 = vpop.f32.mrb[0].mxu0
    %v462 = vadd.f32 %v389, %v461
    %v463 = vpop.f32.mrb[0].mxu0
    %464 = vdwg.mxu0
    %v465 = vmax.f32 %v462, 0.0
    %v466 = vld [vmem:[#allocation10] sm:$0xff]
    %v467 = vld [vmem:[#allocation10 + $0x8] sm:$0xff]
    %v468 = vld [vmem:[#allocation11] sm:$0x1]
    %v470 = vlaneseq
    %v471 = vshrl.u32 %v470, 7
    %v472 = vsub.s32 0, %v471
    %v473 = vrot.slane %v468, %v472
    %vm475 = vcmask 130048
    %v477 = vsel %vm475, %v465, 0
    %479 = vmatprep.subr.mxu0 0.0
    %480 = vmatpush1.msra.mxu0 %v466
    %481 = vmatprep.subr.mxu0 0.0
    %482 = vmatpush1.msra.mxu0 %v467
    %483 = vmatprep.subr.mxu0 0.0
    %484 = vmatpush1.msra.mxu0 0.0
    %485 = vmatprep.subr.mxu0 0.0
    %486 = vmatpush1.msra.mxu0 0.0
    %487 = vmatprep.subr.mxu0 0.0
    %488 = vmatpush1.msra.mxu0 0.0
    %489 = vmatprep.subr.mxu0 0.0
    %490 = vmatpush1.msra.mxu0 0.0
    %491 = vmatprep.subr.mxu0 0.0
    %492 = vmatpush1.msra.mxu0 0.0
    %493 = vmatprep.subr.mxu0 0.0
    %494 = vmatpush1.msra.mxu0 0.0
    %495 = vmatprep.subr.mxu0 0.0
    %496 = vmatpush1.msra.mxu0 0.0
    %497 = vmatprep.subr.mxu0 0.0
    %498 = vmatpush1.msra.mxu0 0.0
    %499 = vmatprep.subr.mxu0 0.0
    %500 = vmatpush1.msra.mxu0 0.0
    %501 = vmatprep.subr.mxu0 0.0
    %502 = vmatpush1.msra.mxu0 0.0
    %503 = vmatprep.subr.mxu0 0.0
    %504 = vmatpush1.msra.mxu0 0.0
    %505 = vmatprep.subr.mxu0 0.0
    %506 = vmatpush1.msra.mxu0 0.0
    %507 = vmatprep.subr.mxu0 0.0
    %508 = vmatpush1.msra.mxu0 0.0
    %509 = vmatprep.subr.mxu0 0.0
    %510 = vmatpush1.msra.mxu0 0.0
    %511 = vmatprep.subr.mxu0 0.0
    %512 = vmatpush1.msra.mxu0 0.0
    %513 = vmatprep.subr.mxu0 0.0
    %514 = vmatpush1.msra.mxu0 0.0
    %515 = vmatprep.subr.mxu0 0.0
    %516 = vmatpush1.msra.mxu0 0.0
    %517 = vmatprep.subr.mxu0 0.0
    %518 = vmatpush1.msra.mxu0 0.0
    %519 = vmatprep.subr.mxu0 0.0
    %520 = vmatpush1.msra.mxu0 0.0
    %521 = vmatprep.subr.mxu0 0.0
    %522 = vmatpush1.msra.mxu0 0.0
    %523 = vmatprep.subr.mxu0 0.0
    %524 = vmatpush1.msra.mxu0 0.0
    %525 = vmatprep.subr.mxu0 0.0
    %526 = vmatpush1.msra.mxu0 0.0
    %527 = vmatprep.subr.mxu0 0.0
    %528 = vmatpush1.msra.mxu0 0.0
    %529 = vmatprep.subr.mxu0 0.0
    %530 = vmatpush1.msra.mxu0 0.0
    %531 = vmatprep.subr.mxu0 0.0
    %532 = vmatpush1.msra.mxu0 0.0
    %533 = vmatprep.subr.mxu0 0.0
    %534 = vmatpush1.msra.mxu0 0.0
    %535 = vmatprep.subr.mxu0 0.0
    %536 = vmatpush1.msra.mxu0 0.0
    %537 = vmatprep.subr.mxu0 0.0
    %538 = vmatpush1.msra.mxu0 0.0
    %539 = vmatprep.subr.mxu0 0.0
    %540 = vmatpush1.msra.mxu0 0.0
    %541 = vmatprep.subr.mxu0 0.0
    %542 = vmatpush1.msra.mxu0 0.0
    %543 = vmatprep.mubr.f32.mxu0 0.0
    %544 = vmatmul.mubr.f32.gmra.mrb[0].mxu0 %v477
    %v545 = vpop.f32.mrb[0].mxu0
    %v546 = vadd.f32 %v473, %v545
    %v547 = vpop.f32.mrb[0].mxu0
    %548 = vdwg.mxu0
    %v549 = vmax.f32 %v546, 0.0
    %v550 = vld [vmem:[#allocation13] sm:$0xff]
    %v551 = vld [vmem:[#allocation13 + $0x8] sm:$0xff]
    %v552 = vld [vmem:[#allocation14] sm:$0x1]
    %v554 = vlaneseq
    %v555 = vshrl.u32 %v554, 7
    %v556 = vsub.s32 0, %v555
    %v557 = vrot.slane %v552, %v556
    %v560 = vsel %vm475, %v549, 0
    %562 = vmatprep.subr.mxu0 0.0
    %563 = vmatpush1.msra.mxu0 %v550
    %564 = vmatprep.subr.mxu0 0.0
    %565 = vmatpush1.msra.mxu0 %v551
    %566 = vmatprep.subr.mxu0 0.0
    %567 = vmatpush1.msra.mxu0 0.0
    %568 = vmatprep.subr.mxu0 0.0
    %569 = vmatpush1.msra.mxu0 0.0
    %570 = vmatprep.subr.mxu0 0.0
    %571 = vmatpush1.msra.mxu0 0.0
    %572 = vmatprep.subr.mxu0 0.0
    %573 = vmatpush1.msra.mxu0 0.0
    %574 = vmatprep.subr.mxu0 0.0
    %575 = vmatpush1.msra.mxu0 0.0
    %576 = vmatprep.subr.mxu0 0.0
    %577 = vmatpush1.msra.mxu0 0.0
    %578 = vmatprep.subr.mxu0 0.0
    %579 = vmatpush1.msra.mxu0 0.0
    %580 = vmatprep.subr.mxu0 0.0
    %581 = vmatpush1.msra.mxu0 0.0
    %582 = vmatprep.subr.mxu0 0.0
    %583 = vmatpush1.msra.mxu0 0.0
    %584 = vmatprep.subr.mxu0 0.0
    %585 = vmatpush1.msra.mxu0 0.0
    %586 = vmatprep.subr.mxu0 0.0
    %587 = vmatpush1.msra.mxu0 0.0
    %588 = vmatprep.subr.mxu0 0.0
    %589 = vmatpush1.msra.mxu0 0.0
    %590 = vmatprep.subr.mxu0 0.0
    %591 = vmatpush1.msra.mxu0 0.0
    %592 = vmatprep.subr.mxu0 0.0
    %593 = vmatpush1.msra.mxu0 0.0
    %594 = vmatprep.subr.mxu0 0.0
    %595 = vmatpush1.msra.mxu0 0.0
    %596 = vmatprep.subr.mxu0 0.0
    %597 = vmatpush1.msra.mxu0 0.0
    %598 = vmatprep.subr.mxu0 0.0
    %599 = vmatpush1.msra.mxu0 0.0
    %600 = vmatprep.subr.mxu0 0.0
    %601 = vmatpush1.msra.mxu0 0.0
    %602 = vmatprep.subr.mxu0 0.0
    %603 = vmatpush1.msra.mxu0 0.0
    %604 = vmatprep.subr.mxu0 0.0
    %605 = vmatpush1.msra.mxu0 0.0
    %606 = vmatprep.subr.mxu0 0.0
    %607 = vmatpush1.msra.mxu0 0.0
    %608 = vmatprep.subr.mxu0 0.0
    %609 = vmatpush1.msra.mxu0 0.0
    %610 = vmatprep.subr.mxu0 0.0
    %611 = vmatpush1.msra.mxu0 0.0
    %612 = vmatprep.subr.mxu0 0.0
    %613 = vmatpush1.msra.mxu0 0.0
    %614 = vmatprep.subr.mxu0 0.0
    %615 = vmatpush1.msra.mxu0 0.0
    %616 = vmatprep.subr.mxu0 0.0
    %617 = vmatpush1.msra.mxu0 0.0
    %618 = vmatprep.subr.mxu0 0.0
    %619 = vmatpush1.msra.mxu0 0.0
    %620 = vmatprep.subr.mxu0 0.0
    %621 = vmatpush1.msra.mxu0 0.0
    %622 = vmatprep.subr.mxu0 0.0
    %623 = vmatpush1.msra.mxu0 0.0
    %624 = vmatprep.subr.mxu0 0.0
    %625 = vmatpush1.msra.mxu0 0.0
    %626 = vmatprep.mubr.f32.mxu0 0.0
    %627 = vmatmul.mubr.f32.gmra.mrb[0].mxu0 %v560
    %v628 = vpop.f32.mrb[0].mxu0
    %v629 = vadd.f32 %v557, %v628
    %v630 = vpop.f32.mrb[0].mxu0
    %631 = vdwg.mxu0
    %v632 = vmax.f32 %v629, 0.0
    %v633 = vld [vmem:[#allocation16] sm:$0xff]
    %v634 = vld [vmem:[#allocation16 + $0x8] sm:$0xff]
    %v635 = vld [vmem:[#allocation16 + $0x10] sm:$0xff]
    %v636 = vld [vmem:[#allocation16 + $0x18] sm:$0xff]
    %v637 = vld [vmem:[#allocation17] sm:$0x1]
    %v639 = vlaneseq
    %v640 = vshrl.u32 %v639, 7
    %v641 = vsub.s32 0, %v640
    %v642 = vrot.slane %v637, %v641
    %v645 = vsel %vm391, %v632, 0
    %647 = vmatprep.subr.mxu0 0.0
    %648 = vmatpush1.msra.mxu0 %v633
    %649 = vmatprep.subr.mxu0 0.0
    %650 = vmatpush1.msra.mxu0 %v634
    %651 = vmatprep.subr.mxu0 0.0
    %652 = vmatpush1.msra.mxu0 %v635
    %653 = vmatprep.subr.mxu0 0.0
    %654 = vmatpush1.msra.mxu0 %v636
    %655 = vmatprep.subr.mxu0 0.0
    %656 = vmatpush1.msra.mxu0 0.0
    %657 = vmatprep.subr.mxu0 0.0
    %658 = vmatpush1.msra.mxu0 0.0
    %659 = vmatprep.subr.mxu0 0.0
    %660 = vmatpush1.msra.mxu0 0.0
    %661 = vmatprep.subr.mxu0 0.0
    %662 = vmatpush1.msra.mxu0 0.0
    %663 = vmatprep.subr.mxu0 0.0
    %664 = vmatpush1.msra.mxu0 0.0
    %665 = vmatprep.subr.mxu0 0.0
    %666 = vmatpush1.msra.mxu0 0.0
    %667 = vmatprep.subr.mxu0 0.0
    %668 = vmatpush1.msra.mxu0 0.0
    %669 = vmatprep.subr.mxu0 0.0
    %670 = vmatpush1.msra.mxu0 0.0
    %671 = vmatprep.subr.mxu0 0.0
    %672 = vmatpush1.msra.mxu0 0.0
    %673 = vmatprep.subr.mxu0 0.0
    %674 = vmatpush1.msra.mxu0 0.0
    %675 = vmatprep.subr.mxu0 0.0
    %676 = vmatpush1.msra.mxu0 0.0
    %677 = vmatprep.subr.mxu0 0.0
    %678 = vmatpush1.msra.mxu0 0.0
    %679 = vmatprep.subr.mxu0 0.0
    %680 = vmatpush1.msra.mxu0 0.0
    %681 = vmatprep.subr.mxu0 0.0
    %682 = vmatpush1.msra.mxu0 0.0
    %683 = vmatprep.subr.mxu0 0.0
    %684 = vmatpush1.msra.mxu0 0.0
    %685 = vmatprep.subr.mxu0 0.0
    %686 = vmatpush1.msra.mxu0 0.0
    %687 = vmatprep.subr.mxu0 0.0
    %688 = vmatpush1.msra.mxu0 0.0
    %689 = vmatprep.subr.mxu0 0.0
    %690 = vmatpush1.msra.mxu0 0.0
    %691 = vmatprep.subr.mxu0 0.0
    %692 = vmatpush1.msra.mxu0 0.0
    %693 = vmatprep.subr.mxu0 0.0
    %694 = vmatpush1.msra.mxu0 0.0
    %695 = vmatprep.subr.mxu0 0.0
    %696 = vmatpush1.msra.mxu0 0.0
    %697 = vmatprep.subr.mxu0 0.0
    %698 = vmatpush1.msra.mxu0 0.0
    %699 = vmatprep.subr.mxu0 0.0
    %700 = vmatpush1.msra.mxu0 0.0
    %701 = vmatprep.subr.mxu0 0.0
    %702 = vmatpush1.msra.mxu0 0.0
    %703 = vmatprep.subr.mxu0 0.0
    %704 = vmatpush1.msra.mxu0 0.0
    %705 = vmatprep.subr.mxu0 0.0
    %706 = vmatpush1.msra.mxu0 0.0
    %707 = vmatprep.subr.mxu0 0.0
    %708 = vmatpush1.msra.mxu0 0.0
    %709 = vmatprep.subr.mxu0 0.0
    %710 = vmatpush1.msra.mxu0 0.0
    %711 = vmatprep.mubr.f32.mxu0 0.0
    %712 = vmatmul.mubr.f32.gmra.mrb[0].mxu0 %v645
    %v713 = vpop.f32.mrb[0].mxu0
    %v714 = vadd.f32 %v642, %v713
    %v715 = vpop.f32.mrb[0].mxu0
    %716 = vdwg.mxu0
    %v717 = vld [vmem:[#allocation19] sm:$0xff]
    %v718 = vld [vmem:[#allocation20] sm:$0x1]
    %v720 = vlaneseq
    %v721 = vshrl.u32 %v720, 7
    %v722 = vsub.s32 0, %v721
    %v723 = vrot.slane %v718, %v722
    %vm725 = vcmask 64512
    %v727 = vsel %vm725, %v714, 0
    %729 = vmatprep.subr.mxu0 0.0
    %730 = vmatpush1.msra.mxu0 %v717
    %731 = vmatprep.subr.mxu0 0.0
    %732 = vmatpush1.msra.mxu0 0.0
    %733 = vmatprep.subr.mxu0 0.0
    %734 = vmatpush1.msra.mxu0 0.0
    %735 = vmatprep.subr.mxu0 0.0
    %736 = vmatpush1.msra.mxu0 0.0
    %737 = vmatprep.subr.mxu0 0.0
    %738 = vmatpush1.msra.mxu0 0.0
    %739 = vmatprep.subr.mxu0 0.0
    %740 = vmatpush1.msra.mxu0 0.0
    %741 = vmatprep.subr.mxu0 0.0
    %742 = vmatpush1.msra.mxu0 0.0
    %743 = vmatprep.subr.mxu0 0.0
    %744 = vmatpush1.msra.mxu0 0.0
    %745 = vmatprep.subr.mxu0 0.0
    %746 = vmatpush1.msra.mxu0 0.0
    %747 = vmatprep.subr.mxu0 0.0
    %748 = vmatpush1.msra.mxu0 0.0
    %749 = vmatprep.subr.mxu0 0.0
    %750 = vmatpush1.msra.mxu0 0.0
    %751 = vmatprep.subr.mxu0 0.0
    %752 = vmatpush1.msra.mxu0 0.0
    %753 = vmatprep.subr.mxu0 0.0
    %754 = vmatpush1.msra.mxu0 0.0
    %755 = vmatprep.subr.mxu0 0.0
    %756 = vmatpush1.msra.mxu0 0.0
    %757 = vmatprep.subr.mxu0 0.0
    %758 = vmatpush1.msra.mxu0 0.0
    %759 = vmatprep.subr.mxu0 0.0
    %760 = vmatpush1.msra.mxu0 0.0
    %761 = vmatprep.subr.mxu0 0.0
    %762 = vmatpush1.msra.mxu0 0.0
    %763 = vmatprep.subr.mxu0 0.0
    %764 = vmatpush1.msra.mxu0 0.0
    %765 = vmatprep.subr.mxu0 0.0
    %766 = vmatpush1.msra.mxu0 0.0
    %767 = vmatprep.subr.mxu0 0.0
    %768 = vmatpush1.msra.mxu0 0.0
    %769 = vmatprep.subr.mxu0 0.0
    %770 = vmatpush1.msra.mxu0 0.0
    %771 = vmatprep.subr.mxu0 0.0
    %772 = vmatpush1.msra.mxu0 0.0
    %773 = vmatprep.subr.mxu0 0.0
    %774 = vmatpush1.msra.mxu0 0.0
    %775 = vmatprep.subr.mxu0 0.0
    %776 = vmatpush1.msra.mxu0 0.0
    %777 = vmatprep.subr.mxu0 0.0
    %778 = vmatpush1.msra.mxu0 0.0
    %779 = vmatprep.subr.mxu0 0.0
    %780 = vmatpush1.msra.mxu0 0.0
    %781 = vmatprep.subr.mxu0 0.0
    %782 = vmatpush1.msra.mxu0 0.0
    %783 = vmatprep.subr.mxu0 0.0
    %784 = vmatpush1.msra.mxu0 0.0
    %785 = vmatprep.subr.mxu0 0.0
    %786 = vmatpush1.msra.mxu0 0.0
    %787 = vmatprep.subr.mxu0 0.0
    %788 = vmatpush1.msra.mxu0 0.0
    %789 = vmatprep.subr.mxu0 0.0
    %790 = vmatpush1.msra.mxu0 0.0
    %791 = vmatprep.subr.mxu0 0.0
    %792 = vmatpush1.msra.mxu0 0.0
    %793 = vmatprep.mubr.f32.mxu0 0.0
    %794 = vmatmul.mubr.f32.gmra.mrb[0].mxu0 %v727
    %v795 = vpop.f32.mrb[0].mxu0
    %v796 = vadd.f32 %v723, %v795
    %v797 = vpop.f32.mrb[0].mxu0
    %798 = vdwg.mxu0
    %v799 = vmax.f32 %v796, 0.0
    %v800 = vld [vmem:[#allocation22] sm:$0xff]
    %v801 = vld [vmem:[#allocation22 + $0x8] sm:$0xff]
    %v802 = vld [vmem:[#allocation22 + $0x10] sm:$0xff]
    %v803 = vld [vmem:[#allocation22 + $0x18] sm:$0xff]
    %v804 = vld [vmem:[#allocation23] sm:$0x1]
    %v806 = vlaneseq
    %v807 = vshrl.u32 %v806, 7
    %v808 = vsub.s32 0, %v807
    %v809 = vrot.slane %v804, %v808
    %v812 = vsel %vm391, %v799, 0
    %814 = vmatprep.subr.mxu0 0.0
    %815 = vmatpush1.msra.mxu0 %v800
    %816 = vmatprep.subr.mxu0 0.0
    %817 = vmatpush1.msra.mxu0 %v801
    %818 = vmatprep.subr.mxu0 0.0
    %819 = vmatpush1.msra.mxu0 %v802
    %820 = vmatprep.subr.mxu0 0.0
    %821 = vmatpush1.msra.mxu0 %v803
    %822 = vmatprep.subr.mxu0 0.0
    %823 = vmatpush1.msra.mxu0 0.0
    %824 = vmatprep.subr.mxu0 0.0
    %825 = vmatpush1.msra.mxu0 0.0
    %826 = vmatprep.subr.mxu0 0.0
    %827 = vmatpush1.msra.mxu0 0.0
    %828 = vmatprep.subr.mxu0 0.0
    %829 = vmatpush1.msra.mxu0 0.0
    %830 = vmatprep.subr.mxu0 0.0
    %831 = vmatpush1.msra.mxu0 0.0
    %832 = vmatprep.subr.mxu0 0.0
    %833 = vmatpush1.msra.mxu0 0.0
    %834 = vmatprep.subr.mxu0 0.0
    %835 = vmatpush1.msra.mxu0 0.0
    %836 = vmatprep.subr.mxu0 0.0
    %837 = vmatpush1.msra.mxu0 0.0
    %838 = vmatprep.subr.mxu0 0.0
    %839 = vmatpush1.msra.mxu0 0.0
    %840 = vmatprep.subr.mxu0 0.0
    %841 = vmatpush1.msra.mxu0 0.0
    %842 = vmatprep.subr.mxu0 0.0
    %843 = vmatpush1.msra.mxu0 0.0
    %844 = vmatprep.subr.mxu0 0.0
    %845 = vmatpush1.msra.mxu0 0.0
    %846 = vmatprep.subr.mxu0 0.0
    %847 = vmatpush1.msra.mxu0 0.0
    %848 = vmatprep.subr.mxu0 0.0
    %849 = vmatpush1.msra.mxu0 0.0
    %850 = vmatprep.subr.mxu0 0.0
    %851 = vmatpush1.msra.mxu0 0.0
    %852 = vmatprep.subr.mxu0 0.0
    %853 = vmatpush1.msra.mxu0 0.0
    %854 = vmatprep.subr.mxu0 0.0
    %855 = vmatpush1.msra.mxu0 0.0
    %856 = vmatprep.subr.mxu0 0.0
    %857 = vmatpush1.msra.mxu0 0.0
    %858 = vmatprep.subr.mxu0 0.0
    %859 = vmatpush1.msra.mxu0 0.0
    %860 = vmatprep.subr.mxu0 0.0
    %861 = vmatpush1.msra.mxu0 0.0
    %862 = vmatprep.subr.mxu0 0.0
    %863 = vmatpush1.msra.mxu0 0.0
    %864 = vmatprep.subr.mxu0 0.0
    %865 = vmatpush1.msra.mxu0 0.0
    %866 = vmatprep.subr.mxu0 0.0
    %867 = vmatpush1.msra.mxu0 0.0
    %868 = vmatprep.subr.mxu0 0.0
    %869 = vmatpush1.msra.mxu0 0.0
    %870 = vmatprep.subr.mxu0 0.0
    %871 = vmatpush1.msra.mxu0 0.0
    %872 = vmatprep.subr.mxu0 0.0
    %873 = vmatpush1.msra.mxu0 0.0
    %874 = vmatprep.subr.mxu0 0.0
    %875 = vmatpush1.msra.mxu0 0.0
    %876 = vmatprep.subr.mxu0 0.0
    %877 = vmatpush1.msra.mxu0 0.0
    %878 = vmatprep.mubr.f32.mxu0 0.0
    %879 = vmatmul.mubr.f32.gmra.mrb[0].mxu0 %v812
    %v880 = vpop.f32.mrb[0].mxu0
    %v881 = vadd.f32 %v809, %v880
    %v882 = vpop.f32.mrb[0].mxu0
    %883 = vdwg.mxu0
    %v884 = vmax.f32 %v881, 0.0
    %v885 = vld [vmem:[#allocation25] sm:$0xff]
    %v886 = vld [vmem:[#allocation25 + $0x8] sm:$0xff]
    %v887 = vld [vmem:[#allocation26] sm:$0x1]
    %v889 = vlaneseq
    %v890 = vshrl.u32 %v889, 7
    %v891 = vsub.s32 0, %v890
    %v892 = vrot.slane %v887, %v891
    %v895 = vsel %vm475, %v884, 0
    %897 = vmatprep.subr.mxu0 0.0
    %898 = vmatpush1.msra.mxu0 %v885
    %899 = vmatprep.subr.mxu0 0.0
    %900 = vmatpush1.msra.mxu0 %v886
    %901 = vmatprep.subr.mxu0 0.0
    %902 = vmatpush1.msra.mxu0 0.0
    %903 = vmatprep.subr.mxu0 0.0
    %904 = vmatpush1.msra.mxu0 0.0
    %905 = vmatprep.subr.mxu0 0.0
    %906 = vmatpush1.msra.mxu0 0.0
    %907 = vmatprep.subr.mxu0 0.0
    %908 = vmatpush1.msra.mxu0 0.0
    %909 = vmatprep.subr.mxu0 0.0
    %910 = vmatpush1.msra.mxu0 0.0
    %911 = vmatprep.subr.mxu0 0.0
    %912 = vmatpush1.msra.mxu0 0.0
    %913 = vmatprep.subr.mxu0 0.0
    %914 = vmatpush1.msra.mxu0 0.0
    %915 = vmatprep.subr.mxu0 0.0
    %916 = vmatpush1.msra.mxu0 0.0
    %917 = vmatprep.subr.mxu0 0.0
    %918 = vmatpush1.msra.mxu0 0.0
    %919 = vmatprep.subr.mxu0 0.0
    %920 = vmatpush1.msra.mxu0 0.0
    %921 = vmatprep.subr.mxu0 0.0
    %922 = vmatpush1.msra.mxu0 0.0
    %923 = vmatprep.subr.mxu0 0.0
    %924 = vmatpush1.msra.mxu0 0.0
    %925 = vmatprep.subr.mxu0 0.0
    %926 = vmatpush1.msra.mxu0 0.0
    %927 = vmatprep.subr.mxu0 0.0
    %928 = vmatpush1.msra.mxu0 0.0
    %929 = vmatprep.subr.mxu0 0.0
    %930 = vmatpush1.msra.mxu0 0.0
    %931 = vmatprep.subr.mxu0 0.0
    %932 = vmatpush1.msra.mxu0 0.0
    %933 = vmatprep.subr.mxu0 0.0
    %934 = vmatpush1.msra.mxu0 0.0
    %935 = vmatprep.subr.mxu0 0.0
    %936 = vmatpush1.msra.mxu0 0.0
    %937 = vmatprep.subr.mxu0 0.0
    %938 = vmatpush1.msra.mxu0 0.0
    %939 = vmatprep.subr.mxu0 0.0
    %940 = vmatpush1.msra.mxu0 0.0
    %941 = vmatprep.subr.mxu0 0.0
    %942 = vmatpush1.msra.mxu0 0.0
    %943 = vmatprep.subr.mxu0 0.0
    %944 = vmatpush1.msra.mxu0 0.0
    %945 = vmatprep.subr.mxu0 0.0
    %946 = vmatpush1.msra.mxu0 0.0
    %947 = vmatprep.subr.mxu0 0.0
    %948 = vmatpush1.msra.mxu0 0.0
    %949 = vmatprep.subr.mxu0 0.0
    %950 = vmatpush1.msra.mxu0 0.0
    %951 = vmatprep.subr.mxu0 0.0
    %952 = vmatpush1.msra.mxu0 0.0
    %953 = vmatprep.subr.mxu0 0.0
    %954 = vmatpush1.msra.mxu0 0.0
    %955 = vmatprep.subr.mxu0 0.0
    %956 = vmatpush1.msra.mxu0 0.0
    %957 = vmatprep.subr.mxu0 0.0
    %958 = vmatpush1.msra.mxu0 0.0
    %959 = vmatprep.subr.mxu0 0.0
    %960 = vmatpush1.msra.mxu0 0.0
    %961 = vmatprep.mubr.f32.mxu0 0.0
    %962 = vmatmul.mubr.f32.gmra.mrb[0].mxu0 %v895
    %v963 = vpop.f32.mrb[0].mxu0
    %v964 = vadd.f32 %v892, %v963
    %v965 = vpop.f32.mrb[0].mxu0
    %966 = vdwg.mxu0
    %v967 = vmax.f32 %v964, 0.0
    %v968 = vld [vmem:[#allocation28] sm:$0xff]
    %v969 = vld [vmem:[#allocation28 + $0x8] sm:$0xff]
    %v970 = vld [vmem:[#allocation29] sm:$0x1]
    %v972 = vlaneseq
    %v973 = vshrl.u32 %v972, 7
    %v974 = vsub.s32 0, %v973
    %v975 = vrot.slane %v970, %v974
    %v978 = vsel %vm475, %v967, 0
    %980 = vmatprep.subr.mxu0 0.0
    %981 = vmatpush1.msra.mxu0 %v968
    %982 = vmatprep.subr.mxu0 0.0
    %983 = vmatpush1.msra.mxu0 %v969
    %984 = vmatprep.subr.mxu0 0.0
    %985 = vmatpush1.msra.mxu0 0.0
    %986 = vmatprep.subr.mxu0 0.0
    %987 = vmatpush1.msra.mxu0 0.0
    %988 = vmatprep.subr.mxu0 0.0
    %989 = vmatpush1.msra.mxu0 0.0
    %990 = vmatprep.subr.mxu0 0.0
    %991 = vmatpush1.msra.mxu0 0.0
    %992 = vmatprep.subr.mxu0 0.0
    %993 = vmatpush1.msra.mxu0 0.0
    %994 = vmatprep.subr.mxu0 0.0
    %995 = vmatpush1.msra.mxu0 0.0
    %996 = vmatprep.subr.mxu0 0.0
    %997 = vmatpush1.msra.mxu0 0.0
    %998 = vmatprep.subr.mxu0 0.0
    %999 = vmatpush1.msra.mxu0 0.0
    %1000 = vmatprep.subr.mxu0 0.0
    %1001 = vmatpush1.msra.mxu0 0.0
    %1002 = vmatprep.subr.mxu0 0.0
    %1003 = vmatpush1.msra.mxu0 0.0
    %1004 = vmatprep.subr.mxu0 0.0
    %1005 = vmatpush1.msra.mxu0 0.0
    %1006 = vmatprep.subr.mxu0 0.0
    %1007 = vmatpush1.msra.mxu0 0.0
    %1008 = vmatprep.subr.mxu0 0.0
    %1009 = vmatpush1.msra.mxu0 0.0
    %1010 = vmatprep.subr.mxu0 0.0
    %1011 = vmatpush1.msra.mxu0 0.0
    %1012 = vmatprep.subr.mxu0 0.0
    %1013 = vmatpush1.msra.mxu0 0.0
    %1014 = vmatprep.subr.mxu0 0.0
    %1015 = vmatpush1.msra.mxu0 0.0
    %1016 = vmatprep.subr.mxu0 0.0
    %1017 = vmatpush1.msra.mxu0 0.0
    %1018 = vmatprep.subr.mxu0 0.0
    %1019 = vmatpush1.msra.mxu0 0.0
    %1020 = vmatprep.subr.mxu0 0.0
    %1021 = vmatpush1.msra.mxu0 0.0
    %1022 = vmatprep.subr.mxu0 0.0
    %1023 = vmatpush1.msra.mxu0 0.0
    %1024 = vmatprep.subr.mxu0 0.0
    %1025 = vmatpush1.msra.mxu0 0.0
    %1026 = vmatprep.subr.mxu0 0.0
    %1027 = vmatpush1.msra.mxu0 0.0
    %1028 = vmatprep.subr.mxu0 0.0
    %1029 = vmatpush1.msra.mxu0 0.0
    %1030 = vmatprep.subr.mxu0 0.0
    %1031 = vmatpush1.msra.mxu0 0.0
    %1032 = vmatprep.subr.mxu0 0.0
    %1033 = vmatpush1.msra.mxu0 0.0
    %1034 = vmatprep.subr.mxu0 0.0
    %1035 = vmatpush1.msra.mxu0 0.0
    %1036 = vmatprep.subr.mxu0 0.0
    %1037 = vmatpush1.msra.mxu0 0.0
    %1038 = vmatprep.subr.mxu0 0.0
    %1039 = vmatpush1.msra.mxu0 0.0
    %1040 = vmatprep.subr.mxu0 0.0
    %1041 = vmatpush1.msra.mxu0 0.0
    %1042 = vmatprep.subr.mxu0 0.0
    %1043 = vmatpush1.msra.mxu0 0.0
    %1044 = vmatprep.mubr.f32.mxu0 0.0
    %1045 = vmatmul.mubr.f32.gmra.mrb[0].mxu0 %v978
    %v1046 = vpop.f32.mrb[0].mxu0
    %v1047 = vadd.f32 %v975, %v1046
    %v1048 = vpop.f32.mrb[0].mxu0
    %1049 = vdwg.mxu0
    %v1050 = vld [vmem:[#allocation31] sm:$0xff]
    %v1051 = vld [vmem:[#allocation31 + $0x8] sm:$0xff]
    %v1052 = vld [vmem:[#allocation31 + $0x10] sm:$0xff]
    %v1053 = vld [vmem:[#allocation31 + $0x18] sm:$0xff]
    %1054 = vmatprep.subr.mxu0 0.0
    %1055 = vmatpush1.msra.mxu0 %v1050
    %1056 = vmatprep.subr.mxu0 0.0
    %1057 = vmatpush1.msra.mxu0 %v1051
    %1058 = vmatprep.subr.mxu0 0.0
    %1059 = vmatpush1.msra.mxu0 %v1052
    %1060 = vmatprep.subr.mxu0 0.0
    %1061 = vmatpush1.msra.mxu0 %v1053
    %1062 = vmatprep.subr.mxu0 0.0
    %1063 = vmatpush1.msra.mxu0 0.0
    %1064 = vmatprep.subr.mxu0 0.0
    %1065 = vmatpush1.msra.mxu0 0.0
    %1066 = vmatprep.subr.mxu0 0.0
    %1067 = vmatpush1.msra.mxu0 0.0
    %1068 = vmatprep.subr.mxu0 0.0
    %1069 = vmatpush1.msra.mxu0 0.0
    %1070 = vmatprep.subr.mxu0 0.0
    %1071 = vmatpush1.msra.mxu0 0.0
    %1072 = vmatprep.subr.mxu0 0.0
    %1073 = vmatpush1.msra.mxu0 0.0
    %1074 = vmatprep.subr.mxu0 0.0
    %1075 = vmatpush1.msra.mxu0 0.0
    %1076 = vmatprep.subr.mxu0 0.0
    %1077 = vmatpush1.msra.mxu0 0.0
    %1078 = vmatprep.subr.mxu0 0.0
    %1079 = vmatpush1.msra.mxu0 0.0
    %1080 = vmatprep.subr.mxu0 0.0
    %1081 = vmatpush1.msra.mxu0 0.0
    %1082 = vmatprep.subr.mxu0 0.0
    %1083 = vmatpush1.msra.mxu0 0.0
    %1084 = vmatprep.subr.mxu0 0.0
    %1085 = vmatpush1.msra.mxu0 0.0
    %1086 = vmatprep.subr.mxu0 0.0
    %1087 = vmatpush1.msra.mxu0 0.0
    %1088 = vmatprep.subr.mxu0 0.0
    %1089 = vmatpush1.msra.mxu0 0.0
    %1090 = vmatprep.subr.mxu0 0.0
    %1091 = vmatpush1.msra.mxu0 0.0
    %1092 = vmatprep.subr.mxu0 0.0
    %1093 = vmatpush1.msra.mxu0 0.0
    %1094 = vmatprep.subr.mxu0 0.0
    %1095 = vmatpush1.msra.mxu0 0.0
    %1096 = vmatprep.subr.mxu0 0.0
    %1097 = vmatpush1.msra.mxu0 0.0
    %1098 = vmatprep.subr.mxu0 0.0
    %1099 = vmatpush1.msra.mxu0 0.0
    %1100 = vmatprep.subr.mxu0 0.0
    %1101 = vmatpush1.msra.mxu0 0.0
    %1102 = vmatprep.subr.mxu0 0.0
    %1103 = vmatpush1.msra.mxu0 0.0
    %1104 = vmatprep.subr.mxu0 0.0
    %1105 = vmatpush1.msra.mxu0 0.0
    %1106 = vmatprep.subr.mxu0 0.0
    %1107 = vmatpush1.msra.mxu0 0.0
    %1108 = vmatprep.subr.mxu0 0.0
    %1109 = vmatpush1.msra.mxu0 0.0
    %1110 = vmatprep.subr.mxu0 0.0
    %1111 = vmatpush1.msra.mxu0 0.0
    %1112 = vmatprep.subr.mxu0 0.0
    %1113 = vmatpush1.msra.mxu0 0.0
    %1114 = vmatprep.subr.mxu0 0.0
    %1115 = vmatpush1.msra.mxu0 0.0
    %1116 = vmatprep.subr.mxu0 0.0
    %1117 = vmatpush1.msra.mxu0 0.0
    %1118 = vmatprep.mubr.f32.mxu0 0.0
    %1119 = vmatmul.mubr.f32.gmra.mrb[0].mxu0 %v393
    %v1120 = vpop.f32.mrb[0].mxu0
    %v1121 = vadd.f32 0.0, %v1120
    %v1122 = vpop.f32.mrb[0].mxu0
    %1123 = vdwg.mxu0
    %v1125 = vsel %vm725, %v378, 0
    %1127 = vmatprep.subr.mxu0 0.0
    %1128 = vmatpush1.msra.mxu0 %v1121
    %1129 = vmatprep.subr.mxu0 0.0
    %1130 = vmatpush1.msra.mxu0 0.0
    %1131 = vmatprep.subr.mxu0 0.0
    %1132 = vmatpush1.msra.mxu0 0.0
    %1133 = vmatprep.subr.mxu0 0.0
    %1134 = vmatpush1.msra.mxu0 0.0
    %1135 = vmatprep.subr.mxu0 0.0
    %1136 = vmatpush1.msra.mxu0 0.0
    %1137 = vmatprep.subr.mxu0 0.0
    %1138 = vmatpush1.msra.mxu0 0.0
    %1139 = vmatprep.subr.mxu0 0.0
    %1140 = vmatpush1.msra.mxu0 0.0
    %1141 = vmatprep.subr.mxu0 0.0
    %1142 = vmatpush1.msra.mxu0 0.0
    %1143 = vmatprep.subr.mxu0 0.0
    %1144 = vmatpush1.msra.mxu0 0.0
    %1145 = vmatprep.subr.mxu0 0.0
    %1146 = vmatpush1.msra.mxu0 0.0
    %1147 = vmatprep.subr.mxu0 0.0
    %1148 = vmatpush1.msra.mxu0 0.0
    %1149 = vmatprep.subr.mxu0 0.0
    %1150 = vmatpush1.msra.mxu0 0.0
    %1151 = vmatprep.subr.mxu0 0.0
    %1152 = vmatpush1.msra.mxu0 0.0
    %1153 = vmatprep.subr.mxu0 0.0
    %1154 = vmatpush1.msra.mxu0 0.0
    %1155 = vmatprep.subr.mxu0 0.0
    %1156 = vmatpush1.msra.mxu0 0.0
    %1157 = vmatprep.subr.mxu0 0.0
    %1158 = vmatpush1.msra.mxu0 0.0
    %1159 = vmatprep.subr.mxu0 0.0
    %1160 = vmatpush1.msra.mxu0 0.0
    %1161 = vmatprep.subr.mxu0 0.0
    %1162 = vmatpush1.msra.mxu0 0.0
    %1163 = vmatprep.subr.mxu0 0.0
    %1164 = vmatpush1.msra.mxu0 0.0
    %1165 = vmatprep.subr.mxu0 0.0
    %1166 = vmatpush1.msra.mxu0 0.0
    %1167 = vmatprep.subr.mxu0 0.0
    %1168 = vmatpush1.msra.mxu0 0.0
    %1169 = vmatprep.subr.mxu0 0.0
    %1170 = vmatpush1.msra.mxu0 0.0
    %1171 = vmatprep.subr.mxu0 0.0
    %1172 = vmatpush1.msra.mxu0 0.0
    %1173 = vmatprep.subr.mxu0 0.0
    %1174 = vmatpush1.msra.mxu0 0.0
    %1175 = vmatprep.subr.mxu0 0.0
    %1176 = vmatpush1.msra.mxu0 0.0
    %1177 = vmatprep.subr.mxu0 0.0
    %1178 = vmatpush1.msra.mxu0 0.0
    %1179 = vmatprep.subr.mxu0 0.0
    %1180 = vmatpush1.msra.mxu0 0.0
    %1181 = vmatprep.subr.mxu0 0.0
    %1182 = vmatpush1.msra.mxu0 0.0
    %1183 = vmatprep.subr.mxu0 0.0
    %1184 = vmatpush1.msra.mxu0 0.0
    %1185 = vmatprep.subr.mxu0 0.0
    %1186 = vmatpush1.msra.mxu0 0.0
    %1187 = vmatprep.subr.mxu0 0.0
    %1188 = vmatpush1.msra.mxu0 0.0
    %1189 = vmatprep.subr.mxu0 0.0
    %1190 = vmatpush1.msra.mxu0 0.0
    %1191 = vmatprep.mubr.f32.mxu0 0.0
    %1192 = vmatmul.mubr.f32.gmra.mrb[0].mxu0 %v1125
    %v1193 = vpop.f32.mrb[0].mxu0
    %v1194 = vadd.f32 0.0, %v1193
    %v1195 = vpop.f32.mrb[0].mxu0
    %1196 = vdwg.mxu0
    %v1197 = vmax.f32 %v1194, 0.0
    %v1198 = vadd.f32 %v1197, %v465
    %v1199 = vld [vmem:[#allocation32] sm:$0xff]
    %v1200 = vld [vmem:[#allocation32 + $0x8] sm:$0xff]
    %v1202 = vsel %vm475, %v1198, 0
    %1204 = vmatprep.subr.mxu0 0.0
    %1205 = vmatpush1.msra.mxu0 %v1199
    %1206 = vmatprep.subr.mxu0 0.0
    %1207 = vmatpush1.msra.mxu0 %v1200
    %1208 = vmatprep.subr.mxu0 0.0
    %1209 = vmatpush1.msra.mxu0 0.0
    %1210 = vmatprep.subr.mxu0 0.0
    %1211 = vmatpush1.msra.mxu0 0.0
    %1212 = vmatprep.subr.mxu0 0.0
    %1213 = vmatpush1.msra.mxu0 0.0
    %1214 = vmatprep.subr.mxu0 0.0
    %1215 = vmatpush1.msra.mxu0 0.0
    %1216 = vmatprep.subr.mxu0 0.0
    %1217 = vmatpush1.msra.mxu0 0.0
    %1218 = vmatprep.subr.mxu0 0.0
    %1219 = vmatpush1.msra.mxu0 0.0
    %1220 = vmatprep.subr.mxu0 0.0
    %1221 = vmatpush1.msra.mxu0 0.0
    %1222 = vmatprep.subr.mxu0 0.0
    %1223 = vmatpush1.msra.mxu0 0.0
    %1224 = vmatprep.subr.mxu0 0.0
    %1225 = vmatpush1.msra.mxu0 0.0
    %1226 = vmatprep.subr.mxu0 0.0
    %1227 = vmatpush1.msra.mxu0 0.0
    %1228 = vmatprep.subr.mxu0 0.0
    %1229 = vmatpush1.msra.mxu0 0.0
    %1230 = vmatprep.subr.mxu0 0.0
    %1231 = vmatpush1.msra.mxu0 0.0
    %1232 = vmatprep.subr.mxu0 0.0
    %1233 = vmatpush1.msra.mxu0 0.0
    %1234 = vmatprep.subr.mxu0 0.0
    %1235 = vmatpush1.msra.mxu0 0.0
    %1236 = vmatprep.subr.mxu0 0.0
    %1237 = vmatpush1.msra.mxu0 0.0
    %1238 = vmatprep.subr.mxu0 0.0
    %1239 = vmatpush1.msra.mxu0 0.0
    %1240 = vmatprep.subr.mxu0 0.0
    %1241 = vmatpush1.msra.mxu0 0.0
    %1242 = vmatprep.subr.mxu0 0.0
    %1243 = vmatpush1.msra.mxu0 0.0
    %1244 = vmatprep.subr.mxu0 0.0
    %1245 = vmatpush1.msra.mxu0 0.0
    %1246 = vmatprep.subr.mxu0 0.0
    %1247 = vmatpush1.msra.mxu0 0.0
    %1248 = vmatprep.subr.mxu0 0.0
    %1249 = vmatpush1.msra.mxu0 0.0
    %1250 = vmatprep.subr.mxu0 0.0
    %1251 = vmatpush1.msra.mxu0 0.0
    %1252 = vmatprep.subr.mxu0 0.0
    %1253 = vmatpush1.msra.mxu0 0.0
    %1254 = vmatprep.subr.mxu0 0.0
    %1255 = vmatpush1.msra.mxu0 0.0
    %1256 = vmatprep.subr.mxu0 0.0
    %1257 = vmatpush1.msra.mxu0 0.0
    %1258 = vmatprep.subr.mxu0 0.0
    %1259 = vmatpush1.msra.mxu0 0.0
    %1260 = vmatprep.subr.mxu0 0.0
    %1261 = vmatpush1.msra.mxu0 0.0
    %1262 = vmatprep.subr.mxu0 0.0
    %1263 = vmatpush1.msra.mxu0 0.0
    %1264 = vmatprep.subr.mxu0 0.0
    %1265 = vmatpush1.msra.mxu0 0.0
    %1266 = vmatprep.subr.mxu0 0.0
    %1267 = vmatpush1.msra.mxu0 0.0
    %1268 = vmatprep.mubr.f32.mxu0 0.0
    %1269 = vmatmul.mubr.f32.gmra.mrb[0].mxu0 %v1202
    %v1270 = vpop.f32.mrb[0].mxu0
    %v1271 = vadd.f32 0.0, %v1270
    %v1272 = vpop.f32.mrb[0].mxu0
    %1273 = vdwg.mxu0
    %1274 = vmatprep.subr.mxu0 0.0
    %1275 = vmatpush1.msra.mxu0 %v1271
    %1276 = vmatprep.subr.mxu0 0.0
    %1277 = vmatpush1.msra.mxu0 0.0
    %1278 = vmatprep.subr.mxu0 0.0
    %1279 = vmatpush1.msra.mxu0 0.0
    %1280 = vmatprep.subr.mxu0 0.0
    %1281 = vmatpush1.msra.mxu0 0.0
    %1282 = vmatprep.subr.mxu0 0.0
    %1283 = vmatpush1.msra.mxu0 0.0
    %1284 = vmatprep.subr.mxu0 0.0
    %1285 = vmatpush1.msra.mxu0 0.0
    %1286 = vmatprep.subr.mxu0 0.0
    %1287 = vmatpush1.msra.mxu0 0.0
    %1288 = vmatprep.subr.mxu0 0.0
    %1289 = vmatpush1.msra.mxu0 0.0
    %1290 = vmatprep.subr.mxu0 0.0
    %1291 = vmatpush1.msra.mxu0 0.0
    %1292 = vmatprep.subr.mxu0 0.0
    %1293 = vmatpush1.msra.mxu0 0.0
    %1294 = vmatprep.subr.mxu0 0.0
    %1295 = vmatpush1.msra.mxu0 0.0
    %1296 = vmatprep.subr.mxu0 0.0
    %1297 = vmatpush1.msra.mxu0 0.0
    %1298 = vmatprep.subr.mxu0 0.0
    %1299 = vmatpush1.msra.mxu0 0.0
    %1300 = vmatprep.subr.mxu0 0.0
    %1301 = vmatpush1.msra.mxu0 0.0
    %1302 = vmatprep.subr.mxu0 0.0
    %1303 = vmatpush1.msra.mxu0 0.0
    %1304 = vmatprep.subr.mxu0 0.0
    %1305 = vmatpush1.msra.mxu0 0.0
    %1306 = vmatprep.subr.mxu0 0.0
    %1307 = vmatpush1.msra.mxu0 0.0
    %1308 = vmatprep.subr.mxu0 0.0
    %1309 = vmatpush1.msra.mxu0 0.0
    %1310 = vmatprep.subr.mxu0 0.0
    %1311 = vmatpush1.msra.mxu0 0.0
    %1312 = vmatprep.subr.mxu0 0.0
    %1313 = vmatpush1.msra.mxu0 0.0
    %1314 = vmatprep.subr.mxu0 0.0
    %1315 = vmatpush1.msra.mxu0 0.0
    %1316 = vmatprep.subr.mxu0 0.0
    %1317 = vmatpush1.msra.mxu0 0.0
    %1318 = vmatprep.subr.mxu0 0.0
    %1319 = vmatpush1.msra.mxu0 0.0
    %1320 = vmatprep.subr.mxu0 0.0
    %1321 = vmatpush1.msra.mxu0 0.0
    %1322 = vmatprep.subr.mxu0 0.0
    %1323 = vmatpush1.msra.mxu0 0.0
    %1324 = vmatprep.subr.mxu0 0.0
    %1325 = vmatpush1.msra.mxu0 0.0
    %1326 = vmatprep.subr.mxu0 0.0
    %1327 = vmatpush1.msra.mxu0 0.0
    %1328 = vmatprep.subr.mxu0 0.0
    %1329 = vmatpush1.msra.mxu0 0.0
    %1330 = vmatprep.subr.mxu0 0.0
    %1331 = vmatpush1.msra.mxu0 0.0
    %1332 = vmatprep.subr.mxu0 0.0
    %1333 = vmatpush1.msra.mxu0 0.0
    %1334 = vmatprep.subr.mxu0 0.0
    %1335 = vmatpush1.msra.mxu0 0.0
    %1336 = vmatprep.subr.mxu0 0.0
    %1337 = vmatpush1.msra.mxu0 0.0
    %1338 = vmatprep.mubr.f32.mxu0 0.0
    %1339 = vmatmul.mubr.f32.gmra.mrb[0].mxu0 %v1125
    %v1340 = vpop.f32.mrb[0].mxu0
    %v1341 = vadd.f32 0.0, %v1340
    %v1342 = vpop.f32.mrb[0].mxu0
    %1343 = vdwg.mxu0
    %v1344 = vmax.f32 %v1341, 0.0
    %v1345 = vadd.f32 %v1344, %v549
    %v1346 = vld [vmem:[#allocation34] sm:$0xff]
    %v1347 = vld [vmem:[#allocation34 + $0x8] sm:$0xff]
    %v1349 = vsel %vm475, %v1345, 0
    %1351 = vmatprep.subr.mxu0 0.0
    %1352 = vmatpush1.msra.mxu0 %v1346
    %1353 = vmatprep.subr.mxu0 0.0
    %1354 = vmatpush1.msra.mxu0 %v1347
    %1355 = vmatprep.subr.mxu0 0.0
    %1356 = vmatpush1.msra.mxu0 0.0
    %1357 = vmatprep.subr.mxu0 0.0
    %1358 = vmatpush1.msra.mxu0 0.0
    %1359 = vmatprep.subr.mxu0 0.0
    %1360 = vmatpush1.msra.mxu0 0.0
    %1361 = vmatprep.subr.mxu0 0.0
    %1362 = vmatpush1.msra.mxu0 0.0
    %1363 = vmatprep.subr.mxu0 0.0
    %1364 = vmatpush1.msra.mxu0 0.0
    %1365 = vmatprep.subr.mxu0 0.0
    %1366 = vmatpush1.msra.mxu0 0.0
    %1367 = vmatprep.subr.mxu0 0.0
    %1368 = vmatpush1.msra.mxu0 0.0
    %1369 = vmatprep.subr.mxu0 0.0
    %1370 = vmatpush1.msra.mxu0 0.0
    %1371 = vmatprep.subr.mxu0 0.0
    %1372 = vmatpush1.msra.mxu0 0.0
    %1373 = vmatprep.subr.mxu0 0.0
    %1374 = vmatpush1.msra.mxu0 0.0
    %1375 = vmatprep.subr.mxu0 0.0
    %1376 = vmatpush1.msra.mxu0 0.0
    %1377 = vmatprep.subr.mxu0 0.0
    %1378 = vmatpush1.msra.mxu0 0.0
    %1379 = vmatprep.subr.mxu0 0.0
    %1380 = vmatpush1.msra.mxu0 0.0
    %1381 = vmatprep.subr.mxu0 0.0
    %1382 = vmatpush1.msra.mxu0 0.0
    %1383 = vmatprep.subr.mxu0 0.0
    %1384 = vmatpush1.msra.mxu0 0.0
    %1385 = vmatprep.subr.mxu0 0.0
    %1386 = vmatpush1.msra.mxu0 0.0
    %1387 = vmatprep.subr.mxu0 0.0
    %1388 = vmatpush1.msra.mxu0 0.0
    %1389 = vmatprep.subr.mxu0 0.0
    %1390 = vmatpush1.msra.mxu0 0.0
    %1391 = vmatprep.subr.mxu0 0.0
    %1392 = vmatpush1.msra.mxu0 0.0
    %1393 = vmatprep.subr.mxu0 0.0
    %1394 = vmatpush1.msra.mxu0 0.0
    %1395 = vmatprep.subr.mxu0 0.0
    %1396 = vmatpush1.msra.mxu0 0.0
    %1397 = vmatprep.subr.mxu0 0.0
    %1398 = vmatpush1.msra.mxu0 0.0
    %1399 = vmatprep.subr.mxu0 0.0
    %1400 = vmatpush1.msra.mxu0 0.0
    %1401 = vmatprep.subr.mxu0 0.0
    %1402 = vmatpush1.msra.mxu0 0.0
    %1403 = vmatprep.subr.mxu0 0.0
    %1404 = vmatpush1.msra.mxu0 0.0
    %1405 = vmatprep.subr.mxu0 0.0
    %1406 = vmatpush1.msra.mxu0 0.0
    %1407 = vmatprep.subr.mxu0 0.0
    %1408 = vmatpush1.msra.mxu0 0.0
    %1409 = vmatprep.subr.mxu0 0.0
    %1410 = vmatpush1.msra.mxu0 0.0
    %1411 = vmatprep.subr.mxu0 0.0
    %1412 = vmatpush1.msra.mxu0 0.0
    %1413 = vmatprep.subr.mxu0 0.0
    %1414 = vmatpush1.msra.mxu0 0.0
    %1415 = vmatprep.mubr.f32.mxu0 0.0
    %1416 = vmatmul.mubr.f32.gmra.mrb[0].mxu0 %v1349
    %v1417 = vpop.f32.mrb[0].mxu0
    %v1418 = vadd.f32 0.0, %v1417
    %v1419 = vpop.f32.mrb[0].mxu0
    %1420 = vdwg.mxu0
    %1421 = vmatprep.subr.mxu0 0.0
    %1422 = vmatpush1.msra.mxu0 %v1418
    %1423 = vmatprep.subr.mxu0 0.0
    %1424 = vmatpush1.msra.mxu0 0.0
    %1425 = vmatprep.subr.mxu0 0.0
    %1426 = vmatpush1.msra.mxu0 0.0
    %1427 = vmatprep.subr.mxu0 0.0
    %1428 = vmatpush1.msra.mxu0 0.0
    %1429 = vmatprep.subr.mxu0 0.0
    %1430 = vmatpush1.msra.mxu0 0.0
    %1431 = vmatprep.subr.mxu0 0.0
    %1432 = vmatpush1.msra.mxu0 0.0
    %1433 = vmatprep.subr.mxu0 0.0
    %1434 = vmatpush1.msra.mxu0 0.0
    %1435 = vmatprep.subr.mxu0 0.0
    %1436 = vmatpush1.msra.mxu0 0.0
    %1437 = vmatprep.subr.mxu0 0.0
    %1438 = vmatpush1.msra.mxu0 0.0
    %1439 = vmatprep.subr.mxu0 0.0
    %1440 = vmatpush1.msra.mxu0 0.0
    %1441 = vmatprep.subr.mxu0 0.0
    %1442 = vmatpush1.msra.mxu0 0.0
    %1443 = vmatprep.subr.mxu0 0.0
    %1444 = vmatpush1.msra.mxu0 0.0
    %1445 = vmatprep.subr.mxu0 0.0
    %1446 = vmatpush1.msra.mxu0 0.0
    %1447 = vmatprep.subr.mxu0 0.0
    %1448 = vmatpush1.msra.mxu0 0.0
    %1449 = vmatprep.subr.mxu0 0.0
    %1450 = vmatpush1.msra.mxu0 0.0
    %1451 = vmatprep.subr.mxu0 0.0
    %1452 = vmatpush1.msra.mxu0 0.0
    %1453 = vmatprep.subr.mxu0 0.0
    %1454 = vmatpush1.msra.mxu0 0.0
    %1455 = vmatprep.subr.mxu0 0.0
    %1456 = vmatpush1.msra.mxu0 0.0
    %1457 = vmatprep.subr.mxu0 0.0
    %1458 = vmatpush1.msra.mxu0 0.0
    %1459 = vmatprep.subr.mxu0 0.0
    %1460 = vmatpush1.msra.mxu0 0.0
    %1461 = vmatprep.subr.mxu0 0.0
    %1462 = vmatpush1.msra.mxu0 0.0
    %1463 = vmatprep.subr.mxu0 0.0
    %1464 = vmatpush1.msra.mxu0 0.0
    %1465 = vmatprep.subr.mxu0 0.0
    %1466 = vmatpush1.msra.mxu0 0.0
    %1467 = vmatprep.subr.mxu0 0.0
    %1468 = vmatpush1.msra.mxu0 0.0
    %1469 = vmatprep.subr.mxu0 0.0
    %1470 = vmatpush1.msra.mxu0 0.0
    %1471 = vmatprep.subr.mxu0 0.0
    %1472 = vmatpush1.msra.mxu0 0.0
    %1473 = vmatprep.subr.mxu0 0.0
    %1474 = vmatpush1.msra.mxu0 0.0
    %1475 = vmatprep.subr.mxu0 0.0
    %1476 = vmatpush1.msra.mxu0 0.0
    %1477 = vmatprep.subr.mxu0 0.0
    %1478 = vmatpush1.msra.mxu0 0.0
    %1479 = vmatprep.subr.mxu0 0.0
    %1480 = vmatpush1.msra.mxu0 0.0
    %1481 = vmatprep.subr.mxu0 0.0
    %1482 = vmatpush1.msra.mxu0 0.0
    %1483 = vmatprep.subr.mxu0 0.0
    %1484 = vmatpush1.msra.mxu0 0.0
    %1485 = vmatprep.mubr.f32.mxu0 0.0
    %1486 = vmatmul.mubr.f32.gmra.mrb[0].mxu0 %v1125
    %v1487 = vpop.f32.mrb[0].mxu0
    %v1488 = vadd.f32 0.0, %v1487
    %v1489 = vpop.f32.mrb[0].mxu0
    %1490 = vdwg.mxu0
    %v1491 = vmax.f32 %v1488, 0.0
    %v1492 = vadd.f32 %v1491, %v632
    %v1493 = vld [vmem:[#allocation35] sm:$0xff]
    %v1494 = vld [vmem:[#allocation35 + $0x8] sm:$0xff]
    %v1495 = vld [vmem:[#allocation35 + $0x10] sm:$0xff]
    %v1496 = vld [vmem:[#allocation35 + $0x18] sm:$0xff]
    %v1498 = vsel %vm391, %v1492, 0
    %1500 = vmatprep.subr.mxu0 0.0
    %1501 = vmatpush1.msra.mxu0 %v1493
    %1502 = vmatprep.subr.mxu0 0.0
    %1503 = vmatpush1.msra.mxu0 %v1494
    %1504 = vmatprep.subr.mxu0 0.0
    %1505 = vmatpush1.msra.mxu0 %v1495
    %1506 = vmatprep.subr.mxu0 0.0
    %1507 = vmatpush1.msra.mxu0 %v1496
    %1508 = vmatprep.subr.mxu0 0.0
    %1509 = vmatpush1.msra.mxu0 0.0
    %1510 = vmatprep.subr.mxu0 0.0
    %1511 = vmatpush1.msra.mxu0 0.0
    %1512 = vmatprep.subr.mxu0 0.0
    %1513 = vmatpush1.msra.mxu0 0.0
    %1514 = vmatprep.subr.mxu0 0.0
    %1515 = vmatpush1.msra.mxu0 0.0
    %1516 = vmatprep.subr.mxu0 0.0
    %1517 = vmatpush1.msra.mxu0 0.0
    %1518 = vmatprep.subr.mxu0 0.0
    %1519 = vmatpush1.msra.mxu0 0.0
    %1520 = vmatprep.subr.mxu0 0.0
    %1521 = vmatpush1.msra.mxu0 0.0
    %1522 = vmatprep.subr.mxu0 0.0
    %1523 = vmatpush1.msra.mxu0 0.0
    %1524 = vmatprep.subr.mxu0 0.0
    %1525 = vmatpush1.msra.mxu0 0.0
    %1526 = vmatprep.subr.mxu0 0.0
    %1527 = vmatpush1.msra.mxu0 0.0
    %1528 = vmatprep.subr.mxu0 0.0
    %1529 = vmatpush1.msra.mxu0 0.0
    %1530 = vmatprep.subr.mxu0 0.0
    %1531 = vmatpush1.msra.mxu0 0.0
    %1532 = vmatprep.subr.mxu0 0.0
    %1533 = vmatpush1.msra.mxu0 0.0
    %1534 = vmatprep.subr.mxu0 0.0
    %1535 = vmatpush1.msra.mxu0 0.0
    %1536 = vmatprep.subr.mxu0 0.0
    %1537 = vmatpush1.msra.mxu0 0.0
    %1538 = vmatprep.subr.mxu0 0.0
    %1539 = vmatpush1.msra.mxu0 0.0
    %1540 = vmatprep.subr.mxu0 0.0
    %1541 = vmatpush1.msra.mxu0 0.0
    %1542 = vmatprep.subr.mxu0 0.0
    %1543 = vmatpush1.msra.mxu0 0.0
    %1544 = vmatprep.subr.mxu0 0.0
    %1545 = vmatpush1.msra.mxu0 0.0
    %1546 = vmatprep.subr.mxu0 0.0
    %1547 = vmatpush1.msra.mxu0 0.0
    %1548 = vmatprep.subr.mxu0 0.0
    %1549 = vmatpush1.msra.mxu0 0.0
    %1550 = vmatprep.subr.mxu0 0.0
    %1551 = vmatpush1.msra.mxu0 0.0
    %1552 = vmatprep.subr.mxu0 0.0
    %1553 = vmatpush1.msra.mxu0 0.0
    %1554 = vmatprep.subr.mxu0 0.0
    %1555 = vmatpush1.msra.mxu0 0.0
    %1556 = vmatprep.subr.mxu0 0.0
    %1557 = vmatpush1.msra.mxu0 0.0
    %1558 = vmatprep.subr.mxu0 0.0
    %1559 = vmatpush1.msra.mxu0 0.0
    %1560 = vmatprep.subr.mxu0 0.0
    %1561 = vmatpush1.msra.mxu0 0.0
    %1562 = vmatprep.subr.mxu0 0.0
    %1563 = vmatpush1.msra.mxu0 0.0
    %1564 = vmatprep.mubr.f32.mxu0 0.0
    %1565 = vmatmul.mubr.f32.gmra.mrb[0].mxu0 %v1498
    %v1566 = vpop.f32.mrb[0].mxu0
    %v1567 = vadd.f32 0.0, %v1566
    %v1568 = vpop.f32.mrb[0].mxu0
    %1569 = vdwg.mxu0
    %1570 = vmatprep.subr.mxu0 0.0
    %1571 = vmatpush1.msra.mxu0 %v1567
    %1572 = vmatprep.subr.mxu0 0.0
    %1573 = vmatpush1.msra.mxu0 0.0
    %1574 = vmatprep.subr.mxu0 0.0
    %1575 = vmatpush1.msra.mxu0 0.0
    %1576 = vmatprep.subr.mxu0 0.0
    %1577 = vmatpush1.msra.mxu0 0.0
    %1578 = vmatprep.subr.mxu0 0.0
    %1579 = vmatpush1.msra.mxu0 0.0
    %1580 = vmatprep.subr.mxu0 0.0
    %1581 = vmatpush1.msra.mxu0 0.0
    %1582 = vmatprep.subr.mxu0 0.0
    %1583 = vmatpush1.msra.mxu0 0.0
    %1584 = vmatprep.subr.mxu0 0.0
    %1585 = vmatpush1.msra.mxu0 0.0
    %1586 = vmatprep.subr.mxu0 0.0
    %1587 = vmatpush1.msra.mxu0 0.0
    %1588 = vmatprep.subr.mxu0 0.0
    %1589 = vmatpush1.msra.mxu0 0.0
    %1590 = vmatprep.subr.mxu0 0.0
    %1591 = vmatpush1.msra.mxu0 0.0
    %1592 = vmatprep.subr.mxu0 0.0
    %1593 = vmatpush1.msra.mxu0 0.0
    %1594 = vmatprep.subr.mxu0 0.0
    %1595 = vmatpush1.msra.mxu0 0.0
    %1596 = vmatprep.subr.mxu0 0.0
    %1597 = vmatpush1.msra.mxu0 0.0
    %1598 = vmatprep.subr.mxu0 0.0
    %1599 = vmatpush1.msra.mxu0 0.0
    %1600 = vmatprep.subr.mxu0 0.0
    %1601 = vmatpush1.msra.mxu0 0.0
    %1602 = vmatprep.subr.mxu0 0.0
    %1603 = vmatpush1.msra.mxu0 0.0
    %1604 = vmatprep.subr.mxu0 0.0
    %1605 = vmatpush1.msra.mxu0 0.0
    %1606 = vmatprep.subr.mxu0 0.0
    %1607 = vmatpush1.msra.mxu0 0.0
    %1608 = vmatprep.subr.mxu0 0.0
    %1609 = vmatpush1.msra.mxu0 0.0
    %1610 = vmatprep.subr.mxu0 0.0
    %1611 = vmatpush1.msra.mxu0 0.0
    %1612 = vmatprep.subr.mxu0 0.0
    %1613 = vmatpush1.msra.mxu0 0.0
    %1614 = vmatprep.subr.mxu0 0.0
    %1615 = vmatpush1.msra.mxu0 0.0
    %1616 = vmatprep.subr.mxu0 0.0
    %1617 = vmatpush1.msra.mxu0 0.0
    %1618 = vmatprep.subr.mxu0 0.0
    %1619 = vmatpush1.msra.mxu0 0.0
    %1620 = vmatprep.subr.mxu0 0.0
    %1621 = vmatpush1.msra.mxu0 0.0
    %1622 = vmatprep.subr.mxu0 0.0
    %1623 = vmatpush1.msra.mxu0 0.0
    %1624 = vmatprep.subr.mxu0 0.0
    %1625 = vmatpush1.msra.mxu0 0.0
    %1626 = vmatprep.subr.mxu0 0.0
    %1627 = vmatpush1.msra.mxu0 0.0
    %1628 = vmatprep.subr.mxu0 0.0
    %1629 = vmatpush1.msra.mxu0 0.0
    %1630 = vmatprep.subr.mxu0 0.0
    %1631 = vmatpush1.msra.mxu0 0.0
    %1632 = vmatprep.subr.mxu0 0.0
    %1633 = vmatpush1.msra.mxu0 0.0
    %1634 = vmatprep.mubr.f32.mxu0 0.0
    %1635 = vmatmul.mubr.f32.gmra.mrb[0].mxu0 %v1125
    %v1636 = vpop.f32.mrb[0].mxu0
    %v1637 = vadd.f32 0.0, %v1636
    %v1638 = vpop.f32.mrb[0].mxu0
    %1639 = vdwg.mxu0
    %v1640 = vmax.f32 %v1637, 0.0
    %v1641 = vadd.f32 %v1640, %v714
    %v1642 = vld [vmem:[#allocation37] sm:$0xff]
    %v1644 = vsel %vm725, %v1641, 0
    %1646 = vmatprep.subr.mxu0 0.0
    %1647 = vmatpush1.msra.mxu0 %v1642
    %1648 = vmatprep.subr.mxu0 0.0
    %1649 = vmatpush1.msra.mxu0 0.0
    %1650 = vmatprep.subr.mxu0 0.0
    %1651 = vmatpush1.msra.mxu0 0.0
    %1652 = vmatprep.subr.mxu0 0.0
    %1653 = vmatpush1.msra.mxu0 0.0
    %1654 = vmatprep.subr.mxu0 0.0
    %1655 = vmatpush1.msra.mxu0 0.0
    %1656 = vmatprep.subr.mxu0 0.0
    %1657 = vmatpush1.msra.mxu0 0.0
    %1658 = vmatprep.subr.mxu0 0.0
    %1659 = vmatpush1.msra.mxu0 0.0
    %1660 = vmatprep.subr.mxu0 0.0
    %1661 = vmatpush1.msra.mxu0 0.0
    %1662 = vmatprep.subr.mxu0 0.0
    %1663 = vmatpush1.msra.mxu0 0.0
    %1664 = vmatprep.subr.mxu0 0.0
    %1665 = vmatpush1.msra.mxu0 0.0
    %1666 = vmatprep.subr.mxu0 0.0
    %1667 = vmatpush1.msra.mxu0 0.0
    %1668 = vmatprep.subr.mxu0 0.0
    %1669 = vmatpush1.msra.mxu0 0.0
    %1670 = vmatprep.subr.mxu0 0.0
    %1671 = vmatpush1.msra.mxu0 0.0
    %1672 = vmatprep.subr.mxu0 0.0
    %1673 = vmatpush1.msra.mxu0 0.0
    %1674 = vmatprep.subr.mxu0 0.0
    %1675 = vmatpush1.msra.mxu0 0.0
    %1676 = vmatprep.subr.mxu0 0.0
    %1677 = vmatpush1.msra.mxu0 0.0
    %1678 = vmatprep.subr.mxu0 0.0
    %1679 = vmatpush1.msra.mxu0 0.0
    %1680 = vmatprep.subr.mxu0 0.0
    %1681 = vmatpush1.msra.mxu0 0.0
    %1682 = vmatprep.subr.mxu0 0.0
    %1683 = vmatpush1.msra.mxu0 0.0
    %1684 = vmatprep.subr.mxu0 0.0
    %1685 = vmatpush1.msra.mxu0 0.0
    %1686 = vmatprep.subr.mxu0 0.0
    %1687 = vmatpush1.msra.mxu0 0.0
    %1688 = vmatprep.subr.mxu0 0.0
    %1689 = vmatpush1.msra.mxu0 0.0
    %1690 = vmatprep.subr.mxu0 0.0
    %1691 = vmatpush1.msra.mxu0 0.0
    %1692 = vmatprep.subr.mxu0 0.0
    %1693 = vmatpush1.msra.mxu0 0.0
    %1694 = vmatprep.subr.mxu0 0.0
    %1695 = vmatpush1.msra.mxu0 0.0
    %1696 = vmatprep.subr.mxu0 0.0
    %1697 = vmatpush1.msra.mxu0 0.0
    %1698 = vmatprep.subr.mxu0 0.0
    %1699 = vmatpush1.msra.mxu0 0.0
    %1700 = vmatprep.subr.mxu0 0.0
    %1701 = vmatpush1.msra.mxu0 0.0
    %1702 = vmatprep.subr.mxu0 0.0
    %1703 = vmatpush1.msra.mxu0 0.0
    %1704 = vmatprep.subr.mxu0 0.0
    %1705 = vmatpush1.msra.mxu0 0.0
    %1706 = vmatprep.subr.mxu0 0.0
    %1707 = vmatpush1.msra.mxu0 0.0
    %1708 = vmatprep.subr.mxu0 0.0
    %1709 = vmatpush1.msra.mxu0 0.0
    %1710 = vmatprep.mubr.f32.mxu0 0.0
    %1711 = vmatmul.mubr.f32.gmra.mrb[0].mxu0 %v1644
    %v1712 = vpop.f32.mrb[0].mxu0
    %v1713 = vadd.f32 0.0, %v1712
    %v1714 = vpop.f32.mrb[0].mxu0
    %1715 = vdwg.mxu0
    %1716 = vmatprep.subr.mxu0 0.0
    %1717 = vmatpush1.msra.mxu0 %v1713
    %1718 = vmatprep.subr.mxu0 0.0
    %1719 = vmatpush1.msra.mxu0 0.0
    %1720 = vmatprep.subr.mxu0 0.0
    %1721 = vmatpush1.msra.mxu0 0.0
    %1722 = vmatprep.subr.mxu0 0.0
    %1723 = vmatpush1.msra.mxu0 0.0
    %1724 = vmatprep.subr.mxu0 0.0
    %1725 = vmatpush1.msra.mxu0 0.0
    %1726 = vmatprep.subr.mxu0 0.0
    %1727 = vmatpush1.msra.mxu0 0.0
    %1728 = vmatprep.subr.mxu0 0.0
    %1729 = vmatpush1.msra.mxu0 0.0
    %1730 = vmatprep.subr.mxu0 0.0
    %1731 = vmatpush1.msra.mxu0 0.0
    %1732 = vmatprep.subr.mxu0 0.0
    %1733 = vmatpush1.msra.mxu0 0.0
    %1734 = vmatprep.subr.mxu0 0.0
    %1735 = vmatpush1.msra.mxu0 0.0
    %1736 = vmatprep.subr.mxu0 0.0
    %1737 = vmatpush1.msra.mxu0 0.0
    %1738 = vmatprep.subr.mxu0 0.0
    %1739 = vmatpush1.msra.mxu0 0.0
    %1740 = vmatprep.subr.mxu0 0.0
    %1741 = vmatpush1.msra.mxu0 0.0
    %1742 = vmatprep.subr.mxu0 0.0
    %1743 = vmatpush1.msra.mxu0 0.0
    %1744 = vmatprep.subr.mxu0 0.0
    %1745 = vmatpush1.msra.mxu0 0.0
    %1746 = vmatprep.subr.mxu0 0.0
    %1747 = vmatpush1.msra.mxu0 0.0
    %1748 = vmatprep.subr.mxu0 0.0
    %1749 = vmatpush1.msra.mxu0 0.0
    %1750 = vmatprep.subr.mxu0 0.0
    %1751 = vmatpush1.msra.mxu0 0.0
    %1752 = vmatprep.subr.mxu0 0.0
    %1753 = vmatpush1.msra.mxu0 0.0
    %1754 = vmatprep.subr.mxu0 0.0
    %1755 = vmatpush1.msra.mxu0 0.0
    %1756 = vmatprep.subr.mxu0 0.0
    %1757 = vmatpush1.msra.mxu0 0.0
    %1758 = vmatprep.subr.mxu0 0.0
    %1759 = vmatpush1.msra.mxu0 0.0
    %1760 = vmatprep.subr.mxu0 0.0
    %1761 = vmatpush1.msra.mxu0 0.0
    %1762 = vmatprep.subr.mxu0 0.0
    %1763 = vmatpush1.msra.mxu0 0.0
    %1764 = vmatprep.subr.mxu0 0.0
    %1765 = vmatpush1.msra.mxu0 0.0
    %1766 = vmatprep.subr.mxu0 0.0
    %1767 = vmatpush1.msra.mxu0 0.0
    %1768 = vmatprep.subr.mxu0 0.0
    %1769 = vmatpush1.msra.mxu0 0.0
    %1770 = vmatprep.subr.mxu0 0.0
    %1771 = vmatpush1.msra.mxu0 0.0
    %1772 = vmatprep.subr.mxu0 0.0
    %1773 = vmatpush1.msra.mxu0 0.0
    %1774 = vmatprep.subr.mxu0 0.0
    %1775 = vmatpush1.msra.mxu0 0.0
    %1776 = vmatprep.subr.mxu0 0.0
    %1777 = vmatpush1.msra.mxu0 0.0
    %1778 = vmatprep.subr.mxu0 0.0
    %1779 = vmatpush1.msra.mxu0 0.0
    %1780 = vmatprep.mubr.f32.mxu0 0.0
    %1781 = vmatmul.mubr.f32.gmra.mrb[0].mxu0 %v1125
    %v1782 = vpop.f32.mrb[0].mxu0
    %v1783 = vadd.f32 0.0, %v1782
    %v1784 = vpop.f32.mrb[0].mxu0
    %1785 = vdwg.mxu0
    %v1787 = vsel %vm725, %v1783, 0
    %1789 = vmatprep.subr.mxu0 0.0
    %1790 = vmatpush1.xpose.msra.mxu0 %v1787
    %1791 = vmatprep.subr.mxu0 0.0
    %1792 = vmatpush1.xpose.msra.mxu0 0.0
    %1793 = vmatprep.subr.mxu0 0.0
    %1794 = vmatpush1.xpose.msra.mxu0 0.0
    %1795 = vmatprep.subr.mxu0 0.0
    %1796 = vmatpush1.xpose.msra.mxu0 0.0
    %1797 = vmatprep.subr.mxu0 0.0
    %1798 = vmatpush1.xpose.msra.mxu0 0.0
    %1799 = vmatprep.subr.mxu0 0.0
    %1800 = vmatpush1.xpose.msra.mxu0 0.0
    %1801 = vmatprep.subr.mxu0 0.0
    %1802 = vmatpush1.xpose.msra.mxu0 0.0
    %1803 = vmatprep.subr.mxu0 0.0
    %1804 = vmatpush1.xpose.msra.mxu0 0.0
    %1805 = vmatprep.subr.mxu0 0.0
    %1806 = vmatpush1.xpose.msra.mxu0 0.0
    %1807 = vmatprep.subr.mxu0 0.0
    %1808 = vmatpush1.xpose.msra.mxu0 0.0
    %1809 = vmatprep.subr.mxu0 0.0
    %1810 = vmatpush1.xpose.msra.mxu0 0.0
    %1811 = vmatprep.subr.mxu0 0.0
    %1812 = vmatpush1.xpose.msra.mxu0 0.0
    %1813 = vmatprep.subr.mxu0 0.0
    %1814 = vmatpush1.xpose.msra.mxu0 0.0
    %1815 = vmatprep.subr.mxu0 0.0
    %1816 = vmatpush1.xpose.msra.mxu0 0.0
    %1817 = vmatprep.subr.mxu0 0.0
    %1818 = vmatpush1.xpose.msra.mxu0 0.0
    %1819 = vmatprep.subr.mxu0 0.0
    %1820 = vmatpush1.xpose.msra.mxu0 0.0
    %1821 = vmatprep.subr.mxu0 0.0
    %1822 = vmatpush1.xpose.msra.mxu0 0.0
    %1823 = vmatprep.subr.mxu0 0.0
    %1824 = vmatpush1.xpose.msra.mxu0 0.0
    %1825 = vmatprep.subr.mxu0 0.0
    %1826 = vmatpush1.xpose.msra.mxu0 0.0
    %1827 = vmatprep.subr.mxu0 0.0
    %1828 = vmatpush1.xpose.msra.mxu0 0.0
    %1829 = vmatprep.subr.mxu0 0.0
    %1830 = vmatpush1.xpose.msra.mxu0 0.0
    %1831 = vmatprep.subr.mxu0 0.0
    %1832 = vmatpush1.xpose.msra.mxu0 0.0
    %1833 = vmatprep.subr.mxu0 0.0
    %1834 = vmatpush1.xpose.msra.mxu0 0.0
    %1835 = vmatprep.subr.mxu0 0.0
    %1836 = vmatpush1.xpose.msra.mxu0 0.0
    %1837 = vmatprep.subr.mxu0 0.0
    %1838 = vmatpush1.xpose.msra.mxu0 0.0
    %1839 = vmatprep.subr.mxu0 0.0
    %1840 = vmatpush1.xpose.msra.mxu0 0.0
    %1841 = vmatprep.subr.mxu0 0.0
    %1842 = vmatpush1.xpose.msra.mxu0 0.0
    %1843 = vmatprep.subr.mxu0 0.0
    %1844 = vmatpush1.xpose.msra.mxu0 0.0
    %1845 = vmatprep.subr.mxu0 0.0
    %1846 = vmatpush1.xpose.msra.mxu0 0.0
    %1847 = vmatprep.subr.mxu0 0.0
    %1848 = vmatpush1.xpose.msra.mxu0 0.0
    %1849 = vmatprep.subr.mxu0 0.0
    %1850 = vmatpush1.xpose.msra.mxu0 0.0
    %1851 = vmatprep.subr.mxu0 0.0
    %1852 = vmatpush1.xpose.msra.mxu0 0.0
    %1853 = vmatprep.mubr.f32.mxu0 0.0
    %1854 = vmatmul.mubr.f32.gmra.mrb[0].mxu0 %v1787
    %v1855 = vpop.f32.mrb[0].mxu0
    %v1856 = vadd.f32 0.0, %v1855
    %v1857 = vpop.f32.mrb[0].mxu0
    %1858 = vdwg.mxu0
    %v1859 = vsub.f32 0.0, %v1856
    %v1860 = vmul.f32 %v1859, 1.442695
    %v1861 = vpow.pop %v1860
    %v1862 = vadd.f32 %v1861, 1.0
    %v1863 = vrcp.pop %v1862
    %v1864 = vsel %vm725, %v1783, -inf
    %1865 = vmax.xlane.f32.xlu0 %v1864
    %v1866 = vpop.xlane.xlu0 %1865
    %v1867 = vsub.f32 %v1783, %v1866
    %v1868 = vmul.f32 %v1867, 1.442695
    %v1869 = vpow.pop %v1868
    %v1870 = vsel %vm725, %v1869, 0.0
    %1871 = vadd.xlane.f32.xlu0 %v1870
    %v1872 = vpop.xlane.xlu0 %1871
    %v1873 = vrcp.pop %v1872
    %v1874 = vmul.f32 %v1869, %v1873
    %v1875 = vmul.f32 %v379, %v379
    %vm1876 = vcmask 60416
    %v1877 = vsel %vm1876, %v1875, 0.0
    %1878 = vadd.xlane.f32.xlu0 %v1877
    %v1879 = vpop.xlane.xlu0 %1878
    %v1880 = vmul.f32 %v714, %v714
    %v1881 = vsel %vm725, %v1880, 0.0
    %1882 = vadd.xlane.f32.xlu0 %v1881
    %v1883 = vpop.xlane.xlu0 %1882
    %v1885 = vsel %vm725, %v379, 0
    %1887 = vmatprep.subr.mxu0 0.0
    %1888 = vmatpush1.xpose.msra.mxu0 %v1885
    %1889 = vmatprep.subr.mxu0 0.0
    %1890 = vmatpush1.xpose.msra.mxu0 0.0
    %1891 = vmatprep.subr.mxu0 0.0
    %1892 = vmatpush1.xpose.msra.mxu0 0.0
    %1893 = vmatprep.subr.mxu0 0.0
    %1894 = vmatpush1.xpose.msra.mxu0 0.0
    %1895 = vmatprep.subr.mxu0 0.0
    %1896 = vmatpush1.xpose.msra.mxu0 0.0
    %1897 = vmatprep.subr.mxu0 0.0
    %1898 = vmatpush1.xpose.msra.mxu0 0.0
    %1899 = vmatprep.subr.mxu0 0.0
    %1900 = vmatpush1.xpose.msra.mxu0 0.0
    %1901 = vmatprep.subr.mxu0 0.0
    %1902 = vmatpush1.xpose.msra.mxu0 0.0
    %1903 = vmatprep.subr.mxu0 0.0
    %1904 = vmatpush1.xpose.msra.mxu0 0.0
    %1905 = vmatprep.subr.mxu0 0.0
    %1906 = vmatpush1.xpose.msra.mxu0 0.0
    %1907 = vmatprep.subr.mxu0 0.0
    %1908 = vmatpush1.xpose.msra.mxu0 0.0
    %1909 = vmatprep.subr.mxu0 0.0
    %1910 = vmatpush1.xpose.msra.mxu0 0.0
    %1911 = vmatprep.subr.mxu0 0.0
    %1912 = vmatpush1.xpose.msra.mxu0 0.0
    %1913 = vmatprep.subr.mxu0 0.0
    %1914 = vmatpush1.xpose.msra.mxu0 0.0
    %1915 = vmatprep.subr.mxu0 0.0
    %1916 = vmatpush1.xpose.msra.mxu0 0.0
    %1917 = vmatprep.subr.mxu0 0.0
    %1918 = vmatpush1.xpose.msra.mxu0 0.0
    %1919 = vmatprep.subr.mxu0 0.0
    %1920 = vmatpush1.xpose.msra.mxu0 0.0
    %1921 = vmatprep.subr.mxu0 0.0
    %1922 = vmatpush1.xpose.msra.mxu0 0.0
    %1923 = vmatprep.subr.mxu0 0.0
    %1924 = vmatpush1.xpose.msra.mxu0 0.0
    %1925 = vmatprep.subr.mxu0 0.0
    %1926 = vmatpush1.xpose.msra.mxu0 0.0
    %1927 = vmatprep.subr.mxu0 0.0
    %1928 = vmatpush1.xpose.msra.mxu0 0.0
    %1929 = vmatprep.subr.mxu0 0.0
    %1930 = vmatpush1.xpose.msra.mxu0 0.0
    %1931 = vmatprep.subr.mxu0 0.0
    %1932 = vmatpush1.xpose.msra.mxu0 0.0
    %1933 = vmatprep.subr.mxu0 0.0
    %1934 = vmatpush1.xpose.msra.mxu0 0.0
    %1935 = vmatprep.subr.mxu0 0.0
    %1936 = vmatpush1.xpose.msra.mxu0 0.0
    %1937 = vmatprep.subr.mxu0 0.0
    %1938 = vmatpush1.xpose.msra.mxu0 0.0
    %1939 = vmatprep.subr.mxu0 0.0
    %1940 = vmatpush1.xpose.msra.mxu0 0.0
    %1941 = vmatprep.subr.mxu0 0.0
    %1942 = vmatpush1.xpose.msra.mxu0 0.0
    %1943 = vmatprep.subr.mxu0 0.0
    %1944 = vmatpush1.xpose.msra.mxu0 0.0
    %1945 = vmatprep.subr.mxu0 0.0
    %1946 = vmatpush1.xpose.msra.mxu0 0.0
    %1947 = vmatprep.subr.mxu0 0.0
    %1948 = vmatpush1.xpose.msra.mxu0 0.0
    %1949 = vmatprep.subr.mxu0 0.0
    %1950 = vmatpush1.xpose.msra.mxu0 0.0
    %1951 = vmatprep.mubr.f32.mxu0 0.0
    %1952 = vmatmul.mubr.f32.gmra.mrb[0].mxu0 %v727
    %v1953 = vpop.f32.mrb[0].mxu0
    %v1954 = vadd.f32 0.0, %v1953
    %v1955 = vpop.f32.mrb[0].mxu0
    %1956 = vdwg.mxu0
    %v1958 = vlaneseq
    %v1959 = vand.u32 %v1958, 127
    %v1960 = vlaneseq
    %v1961 = vshrl.u32 %v1960, 7
    %v1962 = vsub.s32 %v1959, %v1961
    %v1963 = vrot.slane %v1879, %v1962
    %vm1964 = vcmask 1042434
    %v1965 = vsel %vm1964, %v1963, %v1963
    %vm1966 = vcmask 1043459
    %v1967 = vsel %vm1966, %v1963, %v1965
    %vm1968 = vcmask 1044484
    %v1969 = vsel %vm1968, %v1963, %v1967
    %vm1970 = vcmask 1045509
    %v1971 = vsel %vm1970, %v1963, %v1969
    %vm1972 = vcmask 1046534
    %v1973 = vsel %vm1972, %v1963, %v1971
    %vm1974 = vcmask 1047559
    %v1975 = vsel %vm1974, %v1963, %v1973
    %v1977 = vadd.f32 %v1883, %v1975
    %v1978 = vmul.f32 %v1954, 2.0
    %v1979 = vsub.f32 %v1977, %v1978
    %v1980 = vmax.f32 %v1979, 0.0
    %v1981 = vadd.f32 %v1980, 1.0
    %v1982 = vrcp.pop %v1981
    %vm1983 = vcmask 31744
    %v1984 = vsel %vm1983, %v1982, 0.0
    %1985 = vadd.xlane.f32.xlu0 %v1984
    %v1986 = vpop.xlane.xlu0 %1985
    %v1987 = vrcp.pop %v1986
    %v1988 = vmul.f32 %v1982, %v1987
    %v1989 = vmul.f32 %v1783, %v1783
    %v1990 = vsel %vm725, %v1989, 0.0
    %1991 = vadd.xlane.f32.xlu0 %v1990
    %v1992 = vpop.xlane.xlu0 %1991
    %1993 = vmatprep.subr.mxu0 0.0
    %1994 = vmatpush1.xpose.msra.mxu0 %v1885
    %1995 = vmatprep.subr.mxu0 0.0
    %1996 = vmatpush1.xpose.msra.mxu0 0.0
    %1997 = vmatprep.subr.mxu0 0.0
    %1998 = vmatpush1.xpose.msra.mxu0 0.0
    %1999 = vmatprep.subr.mxu0 0.0
    %2000 = vmatpush1.xpose.msra.mxu0 0.0
    %2001 = vmatprep.subr.mxu0 0.0
    %2002 = vmatpush1.xpose.msra.mxu0 0.0
    %2003 = vmatprep.subr.mxu0 0.0
    %2004 = vmatpush1.xpose.msra.mxu0 0.0
    %2005 = vmatprep.subr.mxu0 0.0
    %2006 = vmatpush1.xpose.msra.mxu0 0.0
    %2007 = vmatprep.subr.mxu0 0.0
    %2008 = vmatpush1.xpose.msra.mxu0 0.0
    %2009 = vmatprep.subr.mxu0 0.0
    %2010 = vmatpush1.xpose.msra.mxu0 0.0
    %2011 = vmatprep.subr.mxu0 0.0
    %2012 = vmatpush1.xpose.msra.mxu0 0.0
    %2013 = vmatprep.subr.mxu0 0.0
    %2014 = vmatpush1.xpose.msra.mxu0 0.0
    %2015 = vmatprep.subr.mxu0 0.0
    %2016 = vmatpush1.xpose.msra.mxu0 0.0
    %2017 = vmatprep.subr.mxu0 0.0
    %2018 = vmatpush1.xpose.msra.mxu0 0.0
    %2019 = vmatprep.subr.mxu0 0.0
    %2020 = vmatpush1.xpose.msra.mxu0 0.0
    %2021 = vmatprep.subr.mxu0 0.0
    %2022 = vmatpush1.xpose.msra.mxu0 0.0
    %2023 = vmatprep.subr.mxu0 0.0
    %2024 = vmatpush1.xpose.msra.mxu0 0.0
    %2025 = vmatprep.subr.mxu0 0.0
    %2026 = vmatpush1.xpose.msra.mxu0 0.0
    %2027 = vmatprep.subr.mxu0 0.0
    %2028 = vmatpush1.xpose.msra.mxu0 0.0
    %2029 = vmatprep.subr.mxu0 0.0
    %2030 = vmatpush1.xpose.msra.mxu0 0.0
    %2031 = vmatprep.subr.mxu0 0.0
    %2032 = vmatpush1.xpose.msra.mxu0 0.0
    %2033 = vmatprep.subr.mxu0 0.0
    %2034 = vmatpush1.xpose.msra.mxu0 0.0
    %2035 = vmatprep.subr.mxu0 0.0
    %2036 = vmatpush1.xpose.msra.mxu0 0.0
    %2037 = vmatprep.subr.mxu0 0.0
    %2038 = vmatpush1.xpose.msra.mxu0 0.0
    %2039 = vmatprep.subr.mxu0 0.0
    %2040 = vmatpush1.xpose.msra.mxu0 0.0
    %2041 = vmatprep.subr.mxu0 0.0
    %2042 = vmatpush1.xpose.msra.mxu0 0.0
    %2043 = vmatprep.subr.mxu0 0.0
    %2044 = vmatpush1.xpose.msra.mxu0 0.0
    %2045 = vmatprep.subr.mxu0 0.0
    %2046 = vmatpush1.xpose.msra.mxu0 0.0
    %2047 = vmatprep.subr.mxu0 0.0
    %2048 = vmatpush1.xpose.msra.mxu0 0.0
    %2049 = vmatprep.subr.mxu0 0.0
    %2050 = vmatpush1.xpose.msra.mxu0 0.0
    %2051 = vmatprep.subr.mxu0 0.0
    %2052 = vmatpush1.xpose.msra.mxu0 0.0
    %2053 = vmatprep.subr.mxu0 0.0
    %2054 = vmatpush1.xpose.msra.mxu0 0.0
    %2055 = vmatprep.subr.mxu0 0.0
    %2056 = vmatpush1.xpose.msra.mxu0 0.0
    %2057 = vmatprep.mubr.f32.mxu0 0.0
    %2058 = vmatmul.mubr.f32.gmra.mrb[0].mxu0 %v1787
    %v2059 = vpop.f32.mrb[0].mxu0
    %v2060 = vadd.f32 0.0, %v2059
    %v2061 = vpop.f32.mrb[0].mxu0
    %2062 = vdwg.mxu0
    %v2063 = vadd.f32 %v1992, %v1975
    %v2064 = vmul.f32 %v2060, 2.0
    %v2065 = vsub.f32 %v2063, %v2064
    %v2066 = vmax.f32 %v2065, 0.0
    %v2067 = vadd.f32 %v2066, 1.0
    %v2068 = vrcp.pop %v2067
    %v2069 = vsel %vm1983, %v2068, 0.0
    %2070 = vadd.xlane.f32.xlu0 %v2069
    %v2071 = vpop.xlane.xlu0 %2070
    %v2072 = vrcp.pop %v2071
    %v2073 = vmul.f32 %v2068, %v2072
    %2075 = vrot.lane.b32.xlu0 %v1988, 32
    %v2076 = vpop.permute.xlu0 %2075
    %2079 = vrot.lane.b32.xlu0 %v2073, 36
    %v2080 = vpop.permute.xlu0 %2079
    %2083 = vrot.lane.b32.xlu0 %v1874, 40
    %v2084 = vpop.permute.xlu0 %2083
    %2086 = vrot.lane.b32.xlu0 %v714, 48
    %v2087 = vpop.permute.xlu0 %2086
    %2089 = vrot.lane.b32.xlu0 %v1783, 56
    %v2090 = vpop.permute.xlu0 %2089
    %2093 = vrot.lane.b32.xlu0 %v1863, 64
    %v2094 = vpop.permute.xlu0 %2093
    %v2096 = vsel %vm391, %v1047, %v2076
    %vm2097 = vcmask 293888
    %v2098 = vsel %vm2097, %v2096, %v2080
    %vm2099 = vcmask 326656
    %v2100 = vsel %vm2099, %v2098, %v2084
    %vm2101 = vcmask 392192
    %v2102 = vsel %vm2101, %v2100, %v2087
    %vm2103 = vcmask 457728
    %v2104 = vsel %vm2103, %v2102, %v2090
    %vm2105 = vcmask 523264
    %v2106 = vsel %vm2105, %v2104, %v2094
    %vm2107 = vcmask 588800
    %v2108 = vsel %vm2107, %v2106, 0.0
    %2109 = vst [vmem:[#allocation40] sm:$0xff] %v2108
    // Predicated region
    $region194: #{tpu_custom_call.1} parent=1 // pred_check
      _
    $region195: #{tpu_custom_call.1} parent=1 // pred_check_branch
      %2111 = sbr.rel (0) target = $region197
    $region196: #{tpu_custom_call.1} parent=1 // pred_region
      %s2113 = ssub.s32 128, 128
      %2114 = vsyncadd [#allocation4], %s2113
      %s2116 = sshll.u32 [#allocation40], 4
      %s2117 = int_to_ptr.vmem [resolvable:$true] %s2116
      %2119 = dma.vmem_to_hbm [thread:$0]  %s2117, 128, %s24, [#allocation4]
    $region197: #{tpu_custom_call.1} parent=1 // pred_fallthru
      _
    // Predicated region
    $region198: #{tpu_custom_call.1} parent=1 // pred_check
      _
    $region199: #{tpu_custom_call.1} parent=1 // pred_check_branch
      %2121 = sbr.rel (0) target = $region201
    $region200: #{tpu_custom_call.1} parent=1 // pred_region
      %2122 = dma.done [#allocation4], 128
    $region201: #{tpu_custom_call.1} parent=1 // pred_fallthru
      _
    %2123 = vsyncpa [#allocation3], 1
    %2124 = vsyncpa [#allocation6], 1
    %2125 = vsyncpa [#allocation9], 1
    %2126 = vsyncpa [#allocation12], 1
    %2127 = vsyncpa [#allocation15], 1
    %2128 = vsyncpa [#allocation18], 1
    %2129 = vsyncpa [#allocation21], 1
    %2130 = vsyncpa [#allocation24], 1
    %2131 = vsyncpa [#allocation27], 1
    %2132 = vsyncpa [#allocation30], 1
    %2133 = vsyncpa [#allocation33], 1
    %2134 = vsyncpa [#allocation36], 1
    %2135 = vsyncpa [#allocation39], 1
    %2136 = vsyncpa [#allocation4], 1

</llo_original>
